<compile_context>
chip_gen: v6e
topology: v6e:2x2x1
jax: 0.10.0
libtpu: 0.0.40
codegen_flags: <defaults>
</compile_context>

<pallas_src>
import functools

import jax
import jax.numpy as jnp
from jax.experimental import pallas as pl
from jax.experimental.pallas import tpu as pltpu


# ---------------------------------------------------------------------------
# Generation-aware block budgets.
# ---------------------------------------------------------------------------
@functools.lru_cache(maxsize=None)
def _chip_budget():
    """Returns (per-stream block budget bytes, scoped vmem_limit_bytes)."""
    budget, limit = 4 * 1024 * 1024, 44 * 1024 * 1024          # safe everywhere
    try:
        info = pltpu.get_tpu_info()
        vmem = None
        for name in ("vmem_capacity_bytes", "vmem_size_bytes", "vmem_bytes"):
            vmem = getattr(info, name, None)
            if vmem:
                break
        if vmem:
            if vmem <= 80 * 1024 * 1024:
                # v7x-class: 64 MiB VMEM but 3.2 TB/s HBM -> larger blocks to
                # hide ~0.35us/step overhead; scoped limit well under 64 MiB.
                budget, limit = 6 * 1024 * 1024, 44 * 1024 * 1024
            else:
                # v5e / v6e: 128 MiB physical VMEM; 4 MiB blocks sit near the
                # HBM roofline and 2 streams x 2 buffers + weight + temps stay
                # far below the scoped limit.
                budget, limit = 4 * 1024 * 1024, 48 * 1024 * 1024
    except Exception:  # pragma: no cover — interpret mode / non-TPU backends
        pass
    return budget, limit


def _choose_tiles(c, l, budget_bytes):
    """Pick (cb, lb) for a (1, cb, lb) block whose f32 footprint fits budget.

    Legal block dims for a (N, C, L) array: cb == C or cb % 8 == 0, and
    lb == L or lb % 128 == 0.  cdiv grids are used, so cb/lb need NOT divide
    C/L — tail blocks are masked inside the kernel.
    """
    max_elems = max(budget_bytes // 4, 8 * 128)
    if c * l <= max_elems:
        return c, l                                 # one block per batch sample
    # Prefer lane-dense full-L rows with a channel tile that is a multiple of 8.
    cb = ((max_elems // max(l, 1)) // 8) * 8
    if cb >= 8:
        return min(cb, c), l
    # A full spatial row set is too large: tile the flattened lane dim as well.
    cb = c if c <= 8 else 8
    lb = max(((max_elems // cb) // 128) * 128, 128)
    if lb >= l:
        lb = l
    return cb, lb


# ---------------------------------------------------------------------------
# Kernels.
# ---------------------------------------------------------------------------
def _tail_mask(sq, c, l, cb, lb, mask_c, mask_l):
    """Zero elements of the block lying outside the real (C, L) extent."""
    if mask_c:
        ci = pl.program_id(2)
        ch = jax.lax.broadcasted_iota(jnp.int32, sq.shape, dimension=1)
        sq = jnp.where(ch < (c - ci * cb), sq, 0.0)
    if mask_l:
        li = pl.program_id(1)
        ln = jax.lax.broadcasted_iota(jnp.int32, sq.shape, dimension=2)
        sq = jnp.where(ln < (l - li * lb), sq, 0.0)
    return sq


def _sqerr_partial_kernel(f_ref, r_ref, o_ref, *, c, l, cb, lb, mask_c, mask_l):
    """Partial sum((f - r)^2) over one (1, cb, lb) block (no weight stream)."""
    d = f_ref[...].astype(jnp.float32) - r_ref[...].astype(jnp.float32)
    sq = _tail_mask(d * d, c, l, cb, lb, mask_c, mask_l)
    # NOTE: scalar reduce + single-vreg broadcast kept deliberately: forming an
    # (8,128) vector partial needs a block-sized reshape/relayout (a VMEM copy)
    # that costs more than the XLU epilogue it saves now that blocks are
    # multi-MiB and step counts are small.
    o_ref[...] = jnp.broadcast_to(jnp.sum(sq), o_ref.shape)


def _wsqerr_partial_kernel(f_ref, r_ref, w_ref, o_ref, *, c, l, cb, lb,
                           mask_c, mask_l):
    """Partial sum((f - r)^2 * w); w is (1, 1, lb), broadcast over channels."""
    d = f_ref[...].astype(jnp.float32) - r_ref[...].astype(jnp.float32)
    sq = d * d * w_ref[...].astype(jnp.float32)
    sq = _tail_mask(sq, c, l, cb, lb, mask_c, mask_l)
    o_ref[...] = jnp.broadcast_to(jnp.sum(sq), o_ref.shape)


# ---------------------------------------------------------------------------
# Per-feature Pallas wrapper.
# ---------------------------------------------------------------------------
def _feature_sqerr_sum(fake, real, weights, *, budget_bytes, vmem_limit_bytes):
    """sum((fake - real)^2 [* weights]) with a single pallas_call.

    fake/real: (N, C, H, W) in native dtype (bf16/f16/f32); cast to f32 inside
    the kernel so HBM traffic stays at the native width.
    weights:   optional (N, 1, H, W) f32 per-pixel weights (broadcast over C).
    """
    n, c, h, w = fake.shape
    l = h * w
    # Lane-dense layout: fold H*W into the last (lane) dim so small-W feature
    # maps do not pad lanes 8-16x.  Merging trailing dims is a free reshape.
    fake2 = fake.reshape(n, c, l)
    real2 = real.reshape(n, c, l)

    cb, lb = _choose_tiles(c, l, budget_bytes)
    ct = pl.cdiv(c, cb)
    lt = pl.cdiv(l, lb)
    mask_c = (c % cb) != 0
    mask_l = (l % lb) != 0

    feat_spec = pl.BlockSpec((1, cb, lb), lambda i, li, ci: (i, ci, li))
    # Each grid step writes its own lane-dense (8,128) partial; all grid axes
    # are "parallel" so v7x can shard steps across its two TensorCores.
    out_spec = pl.BlockSpec(
        (1, 8, 128),
        lambda i, li, ci, _lt=lt, _ct=ct: (i * _lt * _ct + li * _ct + ci, 0, 0))
    out_shape = jax.ShapeDtypeStruct((n * lt * ct, 8, 128), jnp.float32)
    cparams = pltpu.CompilerParams(
        dimension_semantics=("parallel", "parallel", "parallel"),
        vmem_limit_bytes=vmem_limit_bytes)
    static = dict(c=c, l=l, cb=cb, lb=lb, mask_c=mask_c, mask_l=mask_l)

    if weights is None:
        partials = pl.pallas_call(
            functools.partial(_sqerr_partial_kernel, **static),
            out_shape=out_shape,
            grid=(n, lt, ct),
            in_specs=[feat_spec, feat_spec],
            out_specs=out_spec,
            compiler_params=cparams,
        )(fake2, real2)
    else:
        w2 = weights.astype(jnp.float32).reshape(n, 1, l)
        # Weight-reuse: w_spec's index_map is constant across the innermost
        # grid axis (ci), so Pallas elides the re-DMA of the (1,1,lb) weight
        # block across channel tiles.  Keep ci as the last grid axis.
        w_spec = pl.BlockSpec((1, 1, lb), lambda i, li, ci: (i, 0, li))
        partials = pl.pallas_call(
            functools.partial(_wsqerr_partial_kernel, **static),
            out_shape=out_shape,
            grid=(n, lt, ct),
            in_specs=[feat_spec, feat_spec, w_spec],
            out_specs=out_spec,
            compiler_params=cparams,
        )(fake2, real2, w2)

    # One meaningful scalar per grid step at [:, 0, 0]; XLA tree-reduces.
    return jnp.sum(partials[:, 0, 0])


# ---------------------------------------------------------------------------
# Loss.
# ---------------------------------------------------------------------------
def _resize_mask(mask, h, w):
    """Bilinear, half-pixel centers, no antialias == F.interpolate(align_corners=False)."""
    n = mask.shape[0]
    return jax.image.resize(mask.astype(jnp.float32), (n, 1, h, w),
                            method="bilinear", antialias=False)


@functools.partial(
    jax.jit,
    static_argnames=("use_mask", "min_pallas_elems", "block_budget_bytes"))
def _loss_fn(fake_feats, real_feats, mask, weight, *, use_mask,
             min_pallas_elems, block_budget_bytes):
    budget, vmem_limit = _chip_budget()
    if block_budget_bytes is not None:
        budget = block_budget_bytes
    masked = use_mask and (mask is not None)

    losses = []
    for f, r in zip(fake_feats, real_feats):
        h, w = f.shape[-2:]
        wts = (1.0 - _resize_mask(mask, h, w)) if masked else None
        if f.size < min_pallas_elems:
            # Tiny deep scales: launch-overhead bound -> let XLA fuse it.
            d = f.astype(jnp.float32) - r.astype(jnp.float32)
            sq = d * d
            if wts is not None:
                sq = sq * wts                       # broadcasts over C
            losses.append(jnp.mean(sq))
        else:
            s = _feature_sqerr_sum(f, r, wts, budget_bytes=budget,
                                   vmem_limit_bytes=vmem_limit)
            losses.append(s / jnp.float32(f.size))
    return jnp.mean(jnp.stack(losses)) * weight


class MaskedFeatureMatchingLoss:
    """JAX/Pallas port of MaksedFeatureMatchingLoss (forward only)."""

    def __init__(self, weight=1, use_mask=False,
                 min_pallas_elements=32 * 1024, block_budget_bytes=None,
                 **kwargs):
        self.weight = weight
        self.use_mask = use_mask
        self.min_pallas_elements = int(min_pallas_elements)
        self.block_budget_bytes = block_budget_bytes

    def __call__(self, discr_fake_features, discr_real_features, mask=None,
                 **kwargs):
        res = _loss_fn(tuple(discr_fake_features), tuple(discr_real_features),
                       mask, jnp.float32(self.weight),
                       use_mask=bool(self.use_mask),
                       min_pallas_elems=self.min_pallas_elements,
                       block_budget_bytes=self.block_budget_bytes)
        return {"loss": {"masked_feature_matching_loss": res},
                "values_to_log": dict()}


# Keep the original (typo'd) name importable as well.
MaksedFeatureMatchingLoss = MaskedFeatureMatchingLoss


def _reference(fake_feats, real_feats, mask, use_mask, weight):
    """Pure-JAX reference for correctness checks."""
    vals = []
    for f, r in zip(fake_feats, real_feats):
        f = f.astype(jnp.float32)
        r = r.astype(jnp.float32)
        if use_mask and mask is not None:
            h, w = f.shape[-2:]
            m = _resize_mask(mask, h, w)
            vals.append(jnp.mean((f - r) ** 2 * (1.0 - m)))
        else:
            vals.append(jnp.mean((f - r) ** 2))
    return jnp.mean(jnp.stack(vals)) * jnp.float32(weight)


if __name__ == "__main__":
    key = jax.random.PRNGKey(0)
    ks = jax.random.split(key, 16)

    # Multi-scale discriminator features (NCHW).  Larger scales take the Pallas
    # kernel; tiny deep scales take the fused-XLA path (launch-overhead bound).
    shapes = [(2, 16, 64, 64), (2, 32, 32, 32), (2, 12, 40, 40),
              (2, 8, 8, 8), (2, 3, 10, 10)]
    fake_feats = [jax.random.normal(ks[i], s, dtype=jnp.float32)
                  for i, s in enumerate(shapes)]
    real_feats = [jax.random.normal(ks[5 + i], s, dtype=jnp.float32)
                  for i, s in enumerate(shapes)]
    mask = jax.nn.sigmoid(
        jax.random.normal(ks[10], (2, 1, 64, 64), dtype=jnp.float32))

    # Masked path (default routing).
    mod_m = MaskedFeatureMatchingLoss(weight=1.5, use_mask=True)
    res_m = jax.block_until_ready(
        mod_m(fake_feats, real_feats, mask=mask)
        ["loss"]["masked_feature_matching_loss"])
    ref_m = _reference(fake_feats, real_feats, mask, True, 1.5)
    assert jnp.allclose(res_m, ref_m, rtol=1e-5, atol=1e-6), (res_m, ref_m)

    # Unmasked path.
    mod_u = MaskedFeatureMatchingLoss(weight=1.0, use_mask=False)
    res_u = jax.block_until_ready(
        mod_u(fake_feats, real_feats)["loss"]["masked_feature_matching_loss"])
    ref_u = _reference(fake_feats, real_feats, None, False, 1.0)
    assert jnp.allclose(res_u, ref_u, rtol=1e-5, atol=1e-6), (res_u, ref_u)

    # Force EVERY feature (incl. tiny ragged shapes) through the Pallas kernel
    # with a tiny block budget so the cdiv channel/lane tail-masking paths run.
    mod_f = MaskedFeatureMatchingLoss(weight=1.5, use_mask=True,
                                      min_pallas_elements=0,
                                      block_budget_bytes=8 * 1024)
    res_f = jax.block_until_ready(
        mod_f(fake_feats, real_feats, mask=mask)
        ["loss"]["masked_feature_matching_loss"])
    assert jnp.allclose(res_f, ref_m, rtol=1e-5, atol=1e-6), (res_f, ref_m)

    mod_fu = MaskedFeatureMatchingLoss(weight=1.0, use_mask=False,
                                       min_pallas_elements=0,
                                       block_budget_bytes=8 * 1024)
    res_fu = jax.block_until_ready(
        mod_fu(fake_feats, real_feats)["loss"]["masked_feature_matching_loss"])
    assert jnp.allclose(res_fu, ref_u, rtol=1e-5, atol=1e-6), (res_fu, ref_u)

    print("KERNEL_OK")
</pallas_src>

<mosaic_0001>
module attributes {stable_mosaic.version = 11 : i64} {
  func.func @_wsqerr_partial_kernel(%arg0: i32, %arg1: i32, %arg2: i32, %arg3: memref<1x12x1600xf32, #tpu.memory_space<vmem>>, %arg4: memref<1x12x1600xf32, #tpu.memory_space<vmem>>, %arg5: memref<1x1x1600xf32, #tpu.memory_space<vmem>>, %arg6: memref<1x8x128xf32, #tpu.memory_space<vmem>>) attributes {dimension_semantics = [#tpu.dimension_semantics<parallel>, #tpu.dimension_semantics<parallel>, #tpu.dimension_semantics<parallel>], iteration_bounds = array<i64: 2, 1, 1>, scalar_prefetch = 0 : i64, scratch_operands = 0 : i64, tpu.core_type = #tpu.core_type<tc>, window_params = [{transform_indices = @transform_0, window_bounds = array<i64: 1, 12, 1600>}, {transform_indices = @transform_1, window_bounds = array<i64: 1, 12, 1600>}, {transform_indices = @transform_2, window_bounds = array<i64: 1, 1, 1600>}, {transform_indices = @transform_3, window_bounds = array<i64: 1, 8, 128>}]} {
    %c0 = arith.constant 0 : index
    %c0_0 = arith.constant 0 : index
    %c0_1 = arith.constant 0 : index
    %0 = vector.load %arg3[%c0, %c0_0, %c0_1] : memref<1x12x1600xf32, #tpu.memory_space<vmem>>, vector<1x12x1600xf32>
    %c0_2 = arith.constant 0 : index
    %c0_3 = arith.constant 0 : index
    %c0_4 = arith.constant 0 : index
    %1 = vector.load %arg4[%c0_2, %c0_3, %c0_4] : memref<1x12x1600xf32, #tpu.memory_space<vmem>>, vector<1x12x1600xf32>
    %2 = arith.subf %0, %1 : vector<1x12x1600xf32>
    %3 = arith.mulf %2, %2 : vector<1x12x1600xf32>
    %c0_5 = arith.constant 0 : index
    %c0_6 = arith.constant 0 : index
    %c0_7 = arith.constant 0 : index
    %4 = vector.load %arg5[%c0_5, %c0_6, %c0_7] : memref<1x1x1600xf32, #tpu.memory_space<vmem>>, vector<1x1x1600xf32>
    %5 = vector.broadcast %4 : vector<1x1x1600xf32> to vector<1x12x1600xf32>
    %6 = arith.mulf %3, %5 : vector<1x12x1600xf32>
    %7 = vector.shape_cast %6 : vector<1x12x1600xf32> to vector<1x1x12x1600xf32>
    %cst = arith.constant dense<0.000000e+00> : vector<1xf32>
    %8 = vector.multi_reduction <add>, %7, %cst [1, 2, 3] : vector<1x1x12x1600xf32> to vector<1xf32>
    %9 = vector.shape_cast %8 : vector<1xf32> to vector<1x1x1x1xf32>
    %10 = vector.extract %9[0, 0, 0, 0] : f32 from vector<1x1x1x1xf32>
    %11 = vector.broadcast %10 : f32 to vector<1x8x128xf32>
    %c0_8 = arith.constant 0 : index
    %c0_9 = arith.constant 0 : index
    %c0_10 = arith.constant 0 : index
    %12 = vector.load %arg6[%c0_8, %c0_9, %c0_10] : memref<1x8x128xf32, #tpu.memory_space<vmem>>, vector<1x8x128xf32>
    tpu.vector_store %arg6[%c0_8, %c0_9, %c0_10], %11 {strides = array<i32>} : memref<1x8x128xf32, #tpu.memory_space<vmem>>, vector<1x8x128xf32>,
    return
  }
  func.func @transform_0(%arg0: i32, %arg1: i32, %arg2: i32) -> (i32, i32, i32) {
    %c0_i32 = arith.constant 0 : i32
    return %arg0, %arg2, %arg1 : i32, i32, i32
  }
  func.func @transform_1(%arg0: i32, %arg1: i32, %arg2: i32) -> (i32, i32, i32) {
    %c0_i32 = arith.constant 0 : i32
    return %arg0, %arg2, %arg1 : i32, i32, i32
  }
  func.func @transform_2(%arg0: i32, %arg1: i32, %arg2: i32) -> (i32, i32, i32) {
    %c0_i32 = arith.constant 0 : i32
    %c0_i32_0 = arith.constant 0 : i32
    return %arg0, %c0_i32, %arg1 : i32, i32, i32
  }
  func.func @transform_3(%arg0: i32, %arg1: i32, %arg2: i32) -> (i32, i32, i32) {
    %c1_i32 = arith.constant 1 : i32
    %0 = arith.muli %arg0, %c1_i32 : i32
    %c1_i32_0 = arith.constant 1 : i32
    %1 = arith.muli %0, %c1_i32_0 : i32
    %c1_i32_1 = arith.constant 1 : i32
    %2 = arith.muli %arg1, %c1_i32_1 : i32
    %3 = arith.addi %1, %2 : i32
    %4 = arith.addi %3, %arg2 : i32
    %c0_i32 = arith.constant 0 : i32
    %c0_i32_2 = arith.constant 0 : i32
    %c0_i32_3 = arith.constant 0 : i32
    return %4, %c0_i32, %c0_i32_2 : i32, i32, i32
  }
}

module attributes {stable_mosaic.version = 11 : i64} {
  func.func @_wsqerr_partial_kernel(%arg0: i32, %arg1: i32, %arg2: i32, %arg3: memref<1x32x1024xf32, #tpu.memory_space<vmem>>, %arg4: memref<1x32x1024xf32, #tpu.memory_space<vmem>>, %arg5: memref<1x1x1024xf32, #tpu.memory_space<vmem>>, %arg6: memref<1x8x128xf32, #tpu.memory_space<vmem>>) attributes {dimension_semantics = [#tpu.dimension_semantics<parallel>, #tpu.dimension_semantics<parallel>, #tpu.dimension_semantics<parallel>], iteration_bounds = array<i64: 2, 1, 1>, scalar_prefetch = 0 : i64, scratch_operands = 0 : i64, tpu.core_type = #tpu.core_type<tc>, window_params = [{transform_indices = @transform_0, window_bounds = array<i64: 1, 32, 1024>}, {transform_indices = @transform_1, window_bounds = array<i64: 1, 32, 1024>}, {transform_indices = @transform_2, window_bounds = array<i64: 1, 1, 1024>}, {transform_indices = @transform_3, window_bounds = array<i64: 1, 8, 128>}]} {
    %c0 = arith.constant 0 : index
    %c0_0 = arith.constant 0 : index
    %c0_1 = arith.constant 0 : index
    %0 = vector.load %arg3[%c0, %c0_0, %c0_1] : memref<1x32x1024xf32, #tpu.memory_space<vmem>>, vector<1x32x1024xf32>
    %c0_2 = arith.constant 0 : index
    %c0_3 = arith.constant 0 : index
    %c0_4 = arith.constant 0 : index
    %1 = vector.load %arg4[%c0_2, %c0_3, %c0_4] : memref<1x32x1024xf32, #tpu.memory_space<vmem>>, vector<1x32x1024xf32>
    %2 = arith.subf %0, %1 : vector<1x32x1024xf32>
    %3 = arith.mulf %2, %2 : vector<1x32x1024xf32>
    %c0_5 = arith.constant 0 : index
    %c0_6 = arith.constant 0 : index
    %c0_7 = arith.constant 0 : index
    %4 = vector.load %arg5[%c0_5, %c0_6, %c0_7] : memref<1x1x1024xf32, #tpu.memory_space<vmem>>, vector<1x1x1024xf32>
    %5 = vector.broadcast %4 : vector<1x1x1024xf32> to vector<1x32x1024xf32>
    %6 = arith.mulf %3, %5 : vector<1x32x1024xf32>
    %7 = vector.shape_cast %6 : vector<1x32x1024xf32> to vector<1x1x32x1024xf32>
    %cst = arith.constant dense<0.000000e+00> : vector<1xf32>
    %8 = vector.multi_reduction <add>, %7, %cst [1, 2, 3] : vector<1x1x32x1024xf32> to vector<1xf32>
    %9 = vector.shape_cast %8 : vector<1xf32> to vector<1x1x1x1xf32>
    %10 = vector.extract %9[0, 0, 0, 0] : f32 from vector<1x1x1x1xf32>
    %11 = vector.broadcast %10 : f32 to vector<1x8x128xf32>
    %c0_8 = arith.constant 0 : index
    %c0_9 = arith.constant 0 : index
    %c0_10 = arith.constant 0 : index
    %12 = vector.load %arg6[%c0_8, %c0_9, %c0_10] : memref<1x8x128xf32, #tpu.memory_space<vmem>>, vector<1x8x128xf32>
    tpu.vector_store %arg6[%c0_8, %c0_9, %c0_10], %11 {strides = array<i32>} : memref<1x8x128xf32, #tpu.memory_space<vmem>>, vector<1x8x128xf32>,
    return
  }
  func.func @transform_0(%arg0: i32, %arg1: i32, %arg2: i32) -> (i32, i32, i32) {
    %c0_i32 = arith.constant 0 : i32
    return %arg0, %arg2, %arg1 : i32, i32, i32
  }
  func.func @transform_1(%arg0: i32, %arg1: i32, %arg2: i32) -> (i32, i32, i32) {
    %c0_i32 = arith.constant 0 : i32
    return %arg0, %arg2, %arg1 : i32, i32, i32
  }
  func.func @transform_2(%arg0: i32, %arg1: i32, %arg2: i32) -> (i32, i32, i32) {
    %c0_i32 = arith.constant 0 : i32
    %c0_i32_0 = arith.constant 0 : i32
    return %arg0, %c0_i32, %arg1 : i32, i32, i32
  }
  func.func @transform_3(%arg0: i32, %arg1: i32, %arg2: i32) -> (i32, i32, i32) {
    %c1_i32 = arith.constant 1 : i32
    %0 = arith.muli %arg0, %c1_i32 : i32
    %c1_i32_0 = arith.constant 1 : i32
    %1 = arith.muli %0, %c1_i32_0 : i32
    %c1_i32_1 = arith.constant 1 : i32
    %2 = arith.muli %arg1, %c1_i32_1 : i32
    %3 = arith.addi %1, %2 : i32
    %4 = arith.addi %3, %arg2 : i32
    %c0_i32 = arith.constant 0 : i32
    %c0_i32_2 = arith.constant 0 : i32
    %c0_i32_3 = arith.constant 0 : i32
    return %4, %c0_i32, %c0_i32_2 : i32, i32, i32
  }
}

module attributes {stable_mosaic.version = 11 : i64} {
  func.func @_wsqerr_partial_kernel(%arg0: i32, %arg1: i32, %arg2: i32, %arg3: memref<1x16x4096xf32, #tpu.memory_space<vmem>>, %arg4: memref<1x16x4096xf32, #tpu.memory_space<vmem>>, %arg5: memref<1x1x4096xf32, #tpu.memory_space<vmem>>, %arg6: memref<1x8x128xf32, #tpu.memory_space<vmem>>) attributes {dimension_semantics = [#tpu.dimension_semantics<parallel>, #tpu.dimension_semantics<parallel>, #tpu.dimension_semantics<parallel>], iteration_bounds = array<i64: 2, 1, 1>, scalar_prefetch = 0 : i64, scratch_operands = 0 : i64, tpu.core_type = #tpu.core_type<tc>, window_params = [{transform_indices = @transform_0, window_bounds = array<i64: 1, 16, 4096>}, {transform_indices = @transform_1, window_bounds = array<i64: 1, 16, 4096>}, {transform_indices = @transform_2, window_bounds = array<i64: 1, 1, 4096>}, {transform_indices = @transform_3, window_bounds = array<i64: 1, 8, 128>}]} {
    %c0 = arith.constant 0 : index
    %c0_0 = arith.constant 0 : index
    %c0_1 = arith.constant 0 : index
    %0 = vector.load %arg3[%c0, %c0_0, %c0_1] : memref<1x16x4096xf32, #tpu.memory_space<vmem>>, vector<1x16x4096xf32>
    %c0_2 = arith.constant 0 : index
    %c0_3 = arith.constant 0 : index
    %c0_4 = arith.constant 0 : index
    %1 = vector.load %arg4[%c0_2, %c0_3, %c0_4] : memref<1x16x4096xf32, #tpu.memory_space<vmem>>, vector<1x16x4096xf32>
    %2 = arith.subf %0, %1 : vector<1x16x4096xf32>
    %3 = arith.mulf %2, %2 : vector<1x16x4096xf32>
    %c0_5 = arith.constant 0 : index
    %c0_6 = arith.constant 0 : index
    %c0_7 = arith.constant 0 : index
    %4 = vector.load %arg5[%c0_5, %c0_6, %c0_7] : memref<1x1x4096xf32, #tpu.memory_space<vmem>>, vector<1x1x4096xf32>
    %5 = vector.broadcast %4 : vector<1x1x4096xf32> to vector<1x16x4096xf32>
    %6 = arith.mulf %3, %5 : vector<1x16x4096xf32>
    %7 = vector.shape_cast %6 : vector<1x16x4096xf32> to vector<1x1x16x4096xf32>
    %cst = arith.constant dense<0.000000e+00> : vector<1xf32>
    %8 = vector.multi_reduction <add>, %7, %cst [1, 2, 3] : vector<1x1x16x4096xf32> to vector<1xf32>
    %9 = vector.shape_cast %8 : vector<1xf32> to vector<1x1x1x1xf32>
    %10 = vector.extract %9[0, 0, 0, 0] : f32 from vector<1x1x1x1xf32>
    %11 = vector.broadcast %10 : f32 to vector<1x8x128xf32>
    %c0_8 = arith.constant 0 : index
    %c0_9 = arith.constant 0 : index
    %c0_10 = arith.constant 0 : index
    %12 = vector.load %arg6[%c0_8, %c0_9, %c0_10] : memref<1x8x128xf32, #tpu.memory_space<vmem>>, vector<1x8x128xf32>
    tpu.vector_store %arg6[%c0_8, %c0_9, %c0_10], %11 {strides = array<i32>} : memref<1x8x128xf32, #tpu.memory_space<vmem>>, vector<1x8x128xf32>,
    return
  }
  func.func @transform_0(%arg0: i32, %arg1: i32, %arg2: i32) -> (i32, i32, i32) {
    %c0_i32 = arith.constant 0 : i32
    return %arg0, %arg2, %arg1 : i32, i32, i32
  }
  func.func @transform_1(%arg0: i32, %arg1: i32, %arg2: i32) -> (i32, i32, i32) {
    %c0_i32 = arith.constant 0 : i32
    return %arg0, %arg2, %arg1 : i32, i32, i32
  }
  func.func @transform_2(%arg0: i32, %arg1: i32, %arg2: i32) -> (i32, i32, i32) {
    %c0_i32 = arith.constant 0 : i32
    %c0_i32_0 = arith.constant 0 : i32
    return %arg0, %c0_i32, %arg1 : i32, i32, i32
  }
  func.func @transform_3(%arg0: i32, %arg1: i32, %arg2: i32) -> (i32, i32, i32) {
    %c1_i32 = arith.constant 1 : i32
    %0 = arith.muli %arg0, %c1_i32 : i32
    %c1_i32_0 = arith.constant 1 : i32
    %1 = arith.muli %0, %c1_i32_0 : i32
    %c1_i32_1 = arith.constant 1 : i32
    %2 = arith.muli %arg1, %c1_i32_1 : i32
    %3 = arith.addi %1, %2 : i32
    %4 = arith.addi %3, %arg2 : i32
    %c0_i32 = arith.constant 0 : i32
    %c0_i32_2 = arith.constant 0 : i32
    %c0_i32_3 = arith.constant 0 : i32
    return %4, %c0_i32, %c0_i32_2 : i32, i32, i32
  }
}

</mosaic_0001>

<llo_original>
// kernel: _loss_fn.4
$region0: #{_loss_fn.4}
  #allocation0 [shape = 'u32[]', space=smem, size = 0x4, offset = 0x4, fixed_abs, tag = 'smem constant byte address 0x4 - core index']
  #allocation1 [shape = 'u32[144,128]{1,0:T(1,128)}', space=vmem, size = 0x12000, scoped, tag = 'internal scratch']
  %s0 = inlined_call_operand.vmem [shape: f32[2,32,1024], index: 0, kind: input, shape index: {}]
  %s1 = inlined_call_operand.vmem [shape: f32[2,32,1024], index: 1, kind: input, shape index: {}]
  %s2 = inlined_call_operand.vmem [shape: f32[2,1,1024], index: 2, kind: input, shape index: {}]
  %s3 = inlined_call_operand.vmem [shape: f32[2,8,128], index: 3, kind: output, shape index: {}]
  %s4 = sld [smem:[#allocation0]]
  $region45: #{_loss_fn.4} parent=0
    _
  %s6 = ssub.s32 1, %s4
  %s7 = scalar_select 0, %s6, %s4
  loop: start=0, step=1, limit=4
  $region2: #{_loss_fn.4} parent=0 // loop_pre_header
    _
  $region3: #{_loss_fn.4} parent=0 // loop_header
    %s9 = sphi 0, %s13
    %p10 = scmp.ge.s32.totalorder %s9, 4
    %s16 = sphi 0, %s35
    %s17 = sphi 0, %s31
    %s18 = sphi 0, %s27
    %s19 = sphi 0, %s16
    %s20 = sphi 0, %s17
    %s21 = sphi 0, %s18
    %s22 = sphi 0, %s19
    %s23 = sphi 0, %s20
    %s24 = sphi 0, %s21
    %s42 = sphi 0, %s44
    %s45 = sphi 0, %s42
    %s46 = sphi 0, %s45
    %s62 = sphi 0, %s46
    %s72 = sphi 0, %s74
    %s75 = sphi 0, %s72
    %s76 = sphi 0, %s75
    %s92 = sphi 0, %s76
    %s100 = sphi 0, %s102
    %s103 = sphi 0, %s100
    %s104 = sphi 0, %s103
    %s120 = sphi 0, %s104
    %s130 = sphi 0, %s132
    %s133 = sphi 0, %s130
    %s134 = sphi 0, %s133
    %s150 = sphi 0, %s134
  $region4: #{_loss_fn.4} parent=0 // loop_header_branch
    %12 = sbr.rel (%p10) target = $region8
  $region5: #{_loss_fn.4} parent=0 // loop_body
    %s14 = ssub.s32 %s9, 1
    %s15 = ssub.s32 %s9, 2
    %s25 = sadd.s32 1, %s18
    %p26 = scmp.ge.s32.totalorder %s25, 1
    %s27 = scalar_select %p26, 0, %s25
    %s28 = sadd.s32 1, %s17
    %s29 = scalar_select %p26, %s28, %s17
    %p30 = scmp.ge.s32.totalorder %s29, 1
    %s31 = scalar_select %p30, 0, %s29
    %s32 = sadd.s32 1, %s16
    %s33 = scalar_select %p30, %s32, %s16
    %p34 = scmp.ge.s32.totalorder %s33, 2
    %s35 = scalar_select %p34, 0, %s33
    %s36 = ssub.s32 %s16, %s35
    %s37 = ssub.s32 %s18, %s27
    %s38 = sor.u32 %s36, %s37
    %s39 = ssub.s32 %s17, %s31
    %s40 = sor.u32 %s38, %s39
    %p41 = scmp.eq.s32.totalorder %s40, 0
    %s43 = sadd.s32 %s42, 1
    %s44 = scalar_select %p41, %s42, %s43
    %p47 = pneg %p41
    %p48 = scmp.eq.s32.totalorder %s9, 1
    %p49 = por %p47, %p48
    %p50 = scmp.ne.s32.totalorder %s42, %s45
    %p51 = scmp.eq.s32.totalorder %s9, 0
    %p52 = por %p50, %p51
    %p53 = scmp.ne.s32.totalorder %s42, %s45
    %p54 = scmp.eq.s32.totalorder %s14, 1
    %p55 = por %p53, %p54
    %p56 = scmp.ne.s32.totalorder %s45, %s46
    %p57 = scmp.eq.s32.totalorder %s14, 0
    %p58 = por %p56, %p57
    %p59 = scmp.ne.s32.totalorder %s45, %s46
    %p60 = scmp.eq.s32.totalorder %s15, 1
    %p61 = por %p59, %p60
    %p63 = scmp.ne.s32.totalorder %s46, %s62
    %p64 = scmp.eq.s32.totalorder %s15, 0
    %p65 = por %p63, %p64
    %s66 = ssub.s32 %s16, %s35
    %s67 = ssub.s32 %s18, %s27
    %s68 = sor.u32 %s66, %s67
    %s69 = ssub.s32 %s17, %s31
    %s70 = sor.u32 %s68, %s69
    %p71 = scmp.eq.s32.totalorder %s70, 0
    %s73 = sadd.s32 %s72, 1
    %s74 = scalar_select %p71, %s72, %s73
    %p77 = pneg %p71
    %p78 = scmp.eq.s32.totalorder %s9, 1
    %p79 = por %p77, %p78
    %p80 = scmp.ne.s32.totalorder %s72, %s75
    %p81 = scmp.eq.s32.totalorder %s9, 0
    %p82 = por %p80, %p81
    %p83 = scmp.ne.s32.totalorder %s72, %s75
    %p84 = scmp.eq.s32.totalorder %s14, 1
    %p85 = por %p83, %p84
    %p86 = scmp.ne.s32.totalorder %s75, %s76
    %p87 = scmp.eq.s32.totalorder %s14, 0
    %p88 = por %p86, %p87
    %p89 = scmp.ne.s32.totalorder %s75, %s76
    %p90 = scmp.eq.s32.totalorder %s15, 1
    %p91 = por %p89, %p90
    %p93 = scmp.ne.s32.totalorder %s76, %s92
    %p94 = scmp.eq.s32.totalorder %s15, 0
    %p95 = por %p93, %p94
    %s96 = ssub.s32 %s16, %s35
    %s97 = ssub.s32 %s17, %s31
    %s98 = sor.u32 %s96, %s97
    %p99 = scmp.eq.s32.totalorder %s98, 0
    %s101 = sadd.s32 %s100, 1
    %s102 = scalar_select %p99, %s100, %s101
    %p105 = pneg %p99
    %p106 = scmp.eq.s32.totalorder %s9, 1
    %p107 = por %p105, %p106
    %p108 = scmp.ne.s32.totalorder %s100, %s103
    %p109 = scmp.eq.s32.totalorder %s9, 0
    %p110 = por %p108, %p109
    %p111 = scmp.ne.s32.totalorder %s100, %s103
    %p112 = scmp.eq.s32.totalorder %s14, 1
    %p113 = por %p111, %p112
    %p114 = scmp.ne.s32.totalorder %s103, %s104
    %p115 = scmp.eq.s32.totalorder %s14, 0
    %p116 = por %p114, %p115
    %p117 = scmp.ne.s32.totalorder %s103, %s104
    %p118 = scmp.eq.s32.totalorder %s15, 1
    %p119 = por %p117, %p118
    %p121 = scmp.ne.s32.totalorder %s104, %s120
    %p122 = scmp.eq.s32.totalorder %s15, 0
    %p123 = por %p121, %p122
    %s124 = sadd.s32 %s16, %s17
    %s125 = sadd.s32 %s124, %s18
    %s126 = sadd.s32 %s35, %s31
    %s127 = sadd.s32 %s126, %s27
    %s128 = ssub.s32 %s125, %s127
    %p129 = scmp.eq.s32.totalorder %s128, 0
    %s131 = sadd.s32 %s130, 1
    %s132 = scalar_select %p129, %s130, %s131
    %p135 = pneg %p129
    %p136 = scmp.eq.s32.totalorder %s9, 1
    %p137 = por %p135, %p136
    %p138 = scmp.ne.s32.totalorder %s130, %s133
    %p139 = scmp.eq.s32.totalorder %s9, 0
    %p140 = por %p138, %p139
    %p141 = scmp.ne.s32.totalorder %s130, %s133
    %p142 = scmp.eq.s32.totalorder %s14, 1
    %p143 = por %p141, %p142
    %p144 = scmp.ne.s32.totalorder %s133, %s134
    %p145 = scmp.eq.s32.totalorder %s14, 0
    %p146 = por %p144, %p145
    %p147 = scmp.ne.s32.totalorder %s133, %s134
    %p148 = scmp.eq.s32.totalorder %s15, 1
    %p149 = por %p147, %p148
    %p151 = scmp.ne.s32.totalorder %s134, %s150
    %p152 = scmp.eq.s32.totalorder %s15, 0
    %p153 = por %p151, %p152
    %p154 = scmp.le.s32.totalorder 1, %s9
    %p155 = scmp.lt.s32.totalorder %s9, 3
    %p156 = pnand %p154, %p155
    %p157 = pneg %p156
    // Predicated region
    $region9: #{_loss_fn.4} parent=5 // pred_check
      _
    $region10: #{_loss_fn.4} parent=5 // pred_check_branch
      %159 = sbr.rel (%p156) target = $region12
    $region11: #{_loss_fn.4} parent=5 // pred_region
      %s160 = ssub.s32 %s9, 1
    $region12: #{_loss_fn.4} parent=5 // pred_fallthru
      _
    %p161 = scmp.lt.s32.totalorder %s9, 2
    // Predicated region
    $region13: #{_loss_fn.4} parent=5 // pred_check
      %p162 = pneg %p161
    $region14: #{_loss_fn.4} parent=5 // pred_check_branch
      %164 = sbr.rel (%p162) target = $region16
    $region15: #{_loss_fn.4} parent=5 // pred_region
      // Predicated region
      $region17: #{_loss_fn.4} parent=15 // pred_check
        %p165 = pneg %p52
      $region18: #{_loss_fn.4} parent=15 // pred_check_branch
        %167 = sbr.rel (%p165) target = $region20
      $region19: #{_loss_fn.4} parent=15 // pred_region
        %s168 = smul.u32 4, %s18
        %s169 = smul.u32 8, %s17
        %p170 = scmp.lt.s32.totalorder %s16, 1
        %s171 = scalar_select %p170, %s16, 1
        %p172 = scmp.lt.s32.totalorder %s168, 3
        %s173 = scalar_select %p172, %s168, 3
        %p174 = scmp.lt.s32.totalorder %s169, 7
        %s175 = scalar_select %p174, %s169, 7
        %s176 = smul.addr %s173, 8
        %s177 = sadd.s32 %s175, %s176
        %s178 = smul.addr %s171, 32
        %s179 = sadd.s32 %s177, %s178
        %s180 = smul.addr %s179, 8
        %s181 = scalar_lea.vmem %s0, %s180
        %s182 = smul.u32 4, %s18
        %s183 = smul.u32 8, %s17
      $region20: #{_loss_fn.4} parent=15 // pred_fallthru
        _
      // Predicated region
      $region21: #{_loss_fn.4} parent=15 // pred_check
        %p184 = pneg %p82
      $region22: #{_loss_fn.4} parent=15 // pred_check_branch
        %186 = sbr.rel (%p184) target = $region24
      $region23: #{_loss_fn.4} parent=15 // pred_region
        %s187 = smul.u32 4, %s18
        %s188 = smul.u32 8, %s17
        %p189 = scmp.lt.s32.totalorder %s16, 1
        %s190 = scalar_select %p189, %s16, 1
        %p191 = scmp.lt.s32.totalorder %s187, 3
        %s192 = scalar_select %p191, %s187, 3
        %p193 = scmp.lt.s32.totalorder %s188, 7
        %s194 = scalar_select %p193, %s188, 7
        %s195 = smul.addr %s192, 8
        %s196 = sadd.s32 %s194, %s195
        %s197 = smul.addr %s190, 32
        %s198 = sadd.s32 %s196, %s197
        %s199 = smul.addr %s198, 8
        %s200 = scalar_lea.vmem %s1, %s199
        %s201 = smul.u32 4, %s18
        %s202 = smul.u32 8, %s17
      $region24: #{_loss_fn.4} parent=15 // pred_fallthru
        _
      // Predicated region
      $region25: #{_loss_fn.4} parent=15 // pred_check
        %p203 = pneg %p110
      $region26: #{_loss_fn.4} parent=15 // pred_check_branch
        %205 = sbr.rel (%p203) target = $region28
      $region27: #{_loss_fn.4} parent=15 // pred_region
        %s206 = smul.u32 8, %s17
        %p207 = scmp.lt.s32.totalorder %s16, 1
        %s208 = scalar_select %p207, %s16, 1
        %p209 = scmp.lt.s32.totalorder %s206, 7
        %s210 = scalar_select %p209, %s206, 7
        %s211 = smul.addr %s208, 8
        %s212 = sadd.s32 %s210, %s211
        %s213 = scalar_lea.vmem %s2, %s212
        %s214 = smul.u32 8, %s17
      $region28: #{_loss_fn.4} parent=15 // pred_fallthru
        _
    $region16: #{_loss_fn.4} parent=5 // pred_fallthru
      _
    %p215 = scmp.le.s32.totalorder 1, %s9
    %p216 = scmp.lt.s32.totalorder %s9, 3
    %p217 = pnand %p215, %p216
    %p218 = pneg %p217
    // Predicated region
    $region29: #{_loss_fn.4} parent=5 // pred_check
      _
    $region30: #{_loss_fn.4} parent=5 // pred_check_branch
      %220 = sbr.rel (%p217) target = $region32
    $region31: #{_loss_fn.4} parent=5 // pred_region
      %s221 = ssub.s32 %s9, 1
      %s222 = smul.u32 4, %s21
      %s223 = smul.u32 8, %s20
      %p224 = scmp.lt.s32.totalorder %s19, 1
      %s225 = scalar_select %p224, %s19, 1
      %p226 = scmp.lt.s32.totalorder %s222, 3
      %s227 = scalar_select %p226, %s222, 3
      %p228 = scmp.lt.s32.totalorder %s223, 7
      %s229 = scalar_select %p228, %s223, 7
      %s230 = smul.addr %s227, 8
      %s231 = sadd.s32 %s229, %s230
      %s232 = smul.addr %s225, 32
      %s233 = sadd.s32 %s231, %s232
      %s234 = smul.addr %s233, 8
      %s235 = scalar_lea.vmem %s0, %s234
      %p236 = pneg %p58
      %p237 = pneg %p55
      %s238 = smul.u32 4, %s21
      %s239 = smul.u32 8, %s20
      %p240 = scmp.lt.s32.totalorder %s19, 1
      %s241 = scalar_select %p240, %s19, 1
      %p242 = scmp.lt.s32.totalorder %s238, 3
      %s243 = scalar_select %p242, %s238, 3
      %p244 = scmp.lt.s32.totalorder %s239, 7
      %s245 = scalar_select %p244, %s239, 7
      %s246 = smul.addr %s243, 8
      %s247 = sadd.s32 %s245, %s246
      %s248 = smul.addr %s241, 32
      %s249 = sadd.s32 %s247, %s248
      %s250 = smul.addr %s249, 8
      %s251 = scalar_lea.vmem %s1, %s250
      %p252 = pneg %p88
      %p253 = pneg %p85
      %s254 = smul.u32 8, %s20
      %p255 = scmp.lt.s32.totalorder %s19, 1
      %s256 = scalar_select %p255, %s19, 1
      %p257 = scmp.lt.s32.totalorder %s254, 7
      %s258 = scalar_select %p257, %s254, 7
      %s259 = smul.addr %s256, 8
      %s260 = sadd.s32 %s258, %s259
      %s261 = scalar_lea.vmem %s2, %s260
      %p262 = pneg %p116
      %p263 = pneg %p113
      %p264 = pneg %p146
      %p265 = pneg %p143
      %s266 = sadd.s32 %s19, %s20
      %s267 = sadd.s32 %s266, %s21
      %p268 = scmp.lt.s32.totalorder %s267, 1
      %s269 = scalar_select %p268, %s267, 1
      %s270 = smul.addr %s269, 8
      %s271 = scalar_lea.vmem %s3, %s270
      %s272 = smul.u32 4, %s21
      %s273 = smul.u32 8, %s20
      %p274 = scmp.lt.s32.totalorder %s19, 1
      %s275 = scalar_select %p274, %s19, 1
      %p276 = scmp.lt.s32.totalorder %s272, 3
      %s277 = scalar_select %p276, %s272, 3
      %p278 = scmp.lt.s32.totalorder %s273, 7
      %s279 = scalar_select %p278, %s273, 7
      %s280 = smul.addr %s277, 8
      %s281 = sadd.s32 %s279, %s280
      %s282 = smul.addr %s275, 32
      %s283 = sadd.s32 %s281, %s282
      %s284 = smul.addr %s283, 8
      %s285 = scalar_lea.vmem %s0, %s284
      %s286 = smul.u32 4, %s21
      %s287 = smul.u32 8, %s20
      %s288 = smul.u32 4, %s21
      %s289 = smul.u32 8, %s20
      %p290 = scmp.lt.s32.totalorder %s19, 1
      %s291 = scalar_select %p290, %s19, 1
      %p292 = scmp.lt.s32.totalorder %s288, 3
      %s293 = scalar_select %p292, %s288, 3
      %p294 = scmp.lt.s32.totalorder %s289, 7
      %s295 = scalar_select %p294, %s289, 7
      %s296 = smul.addr %s293, 8
      %s297 = sadd.s32 %s295, %s296
      %s298 = smul.addr %s291, 32
      %s299 = sadd.s32 %s297, %s298
      %s300 = smul.addr %s299, 8
      %s301 = scalar_lea.vmem %s1, %s300
      %s302 = smul.u32 4, %s21
      %s303 = smul.u32 8, %s20
      %s304 = smul.u32 8, %s20
      %p305 = scmp.lt.s32.totalorder %s19, 1
      %s306 = scalar_select %p305, %s19, 1
      %p307 = scmp.lt.s32.totalorder %s304, 7
      %s308 = scalar_select %p307, %s304, 7
      %s309 = smul.addr %s306, 8
      %s310 = sadd.s32 %s308, %s309
      %s311 = scalar_lea.vmem %s2, %s310
      %s312 = smul.u32 8, %s20
      %s313 = sadd.s32 %s19, %s20
      %s314 = sadd.s32 %s313, %s21
      %p315 = scmp.lt.s32.totalorder %s314, 1
      %s316 = scalar_select %p315, %s314, 1
      %s317 = smul.addr %s316, 8
      %s318 = scalar_lea.vmem %s3, %s317
      %s319 = sadd.s32 %s19, %s20
      %s320 = sadd.s32 %s319, %s21
      %v321 = vld [vmem:[%s285] sm:$0xff]
      %v322 = vld [vmem:[%s285 + $0x8] sm:$0xff]
      %v323 = vld [vmem:[%s285 + $0x10] sm:$0xff]
      %v324 = vld [vmem:[%s285 + $0x18] sm:$0xff]
      %v325 = vld [vmem:[%s285 + $0x20] sm:$0xff]
      %v326 = vld [vmem:[%s285 + $0x28] sm:$0xff]
      %v327 = vld [vmem:[%s285 + $0x30] sm:$0xff]
      %v328 = vld [vmem:[%s285 + $0x38] sm:$0xff]
      %v329 = vld [vmem:[%s285 + $0x40] sm:$0xff]
      %v330 = vld [vmem:[%s285 + $0x48] sm:$0xff]
      %v331 = vld [vmem:[%s285 + $0x50] sm:$0xff]
      %v332 = vld [vmem:[%s285 + $0x58] sm:$0xff]
      %v333 = vld [vmem:[%s285 + $0x60] sm:$0xff]
      %v334 = vld [vmem:[%s285 + $0x68] sm:$0xff]
      %v335 = vld [vmem:[%s285 + $0x70] sm:$0xff]
      %v336 = vld [vmem:[%s285 + $0x78] sm:$0xff]
      %v337 = vld [vmem:[%s285 + $0x80] sm:$0xff]
      %v338 = vld [vmem:[%s285 + $0x88] sm:$0xff]
      %v339 = vld [vmem:[%s285 + $0x90] sm:$0xff]
      %v340 = vld [vmem:[%s285 + $0x98] sm:$0xff]
      %v341 = vld [vmem:[%s285 + $0xa0] sm:$0xff]
      %v342 = vld [vmem:[%s285 + $0xa8] sm:$0xff]
      %v343 = vld [vmem:[%s285 + $0xb0] sm:$0xff]
      %v344 = vld [vmem:[%s285 + $0xb8] sm:$0xff]
      %v345 = vld [vmem:[%s285 + $0xc0] sm:$0xff]
      %v346 = vld [vmem:[%s285 + $0xc8] sm:$0xff]
      %v347 = vld [vmem:[%s285 + $0xd0] sm:$0xff]
      %v348 = vld [vmem:[%s285 + $0xd8] sm:$0xff]
      %v349 = vld [vmem:[%s285 + $0xe0] sm:$0xff]
      %v350 = vld [vmem:[%s285 + $0xe8] sm:$0xff]
      %v351 = vld [vmem:[%s285 + $0xf0] sm:$0xff]
      %v352 = vld [vmem:[%s285 + $0xf8] sm:$0xff]
      %v353 = vld [vmem:[%s301] sm:$0xff]
      %v354 = vld [vmem:[%s301 + $0x8] sm:$0xff]
      %v355 = vld [vmem:[%s301 + $0x10] sm:$0xff]
      %v356 = vld [vmem:[%s301 + $0x18] sm:$0xff]
      %v357 = vld [vmem:[%s301 + $0x20] sm:$0xff]
      %v358 = vld [vmem:[%s301 + $0x28] sm:$0xff]
      %v359 = vld [vmem:[%s301 + $0x30] sm:$0xff]
      %v360 = vld [vmem:[%s301 + $0x38] sm:$0xff]
      %v361 = vld [vmem:[%s301 + $0x40] sm:$0xff]
      %v362 = vld [vmem:[%s301 + $0x48] sm:$0xff]
      %v363 = vld [vmem:[%s301 + $0x50] sm:$0xff]
      %v364 = vld [vmem:[%s301 + $0x58] sm:$0xff]
      %v365 = vld [vmem:[%s301 + $0x60] sm:$0xff]
      %v366 = vld [vmem:[%s301 + $0x68] sm:$0xff]
      %v367 = vld [vmem:[%s301 + $0x70] sm:$0xff]
      %v368 = vld [vmem:[%s301 + $0x78] sm:$0xff]
      %v369 = vld [vmem:[%s301 + $0x80] sm:$0xff]
      %v370 = vld [vmem:[%s301 + $0x88] sm:$0xff]
      %v371 = vld [vmem:[%s301 + $0x90] sm:$0xff]
      %v372 = vld [vmem:[%s301 + $0x98] sm:$0xff]
      %v373 = vld [vmem:[%s301 + $0xa0] sm:$0xff]
      %v374 = vld [vmem:[%s301 + $0xa8] sm:$0xff]
      %v375 = vld [vmem:[%s301 + $0xb0] sm:$0xff]
      %v376 = vld [vmem:[%s301 + $0xb8] sm:$0xff]
      %v377 = vld [vmem:[%s301 + $0xc0] sm:$0xff]
      %v378 = vld [vmem:[%s301 + $0xc8] sm:$0xff]
      %v379 = vld [vmem:[%s301 + $0xd0] sm:$0xff]
      %v380 = vld [vmem:[%s301 + $0xd8] sm:$0xff]
      %v381 = vld [vmem:[%s301 + $0xe0] sm:$0xff]
      %v382 = vld [vmem:[%s301 + $0xe8] sm:$0xff]
      %v383 = vld [vmem:[%s301 + $0xf0] sm:$0xff]
      %v384 = vld [vmem:[%s301 + $0xf8] sm:$0xff]
      %v385 = vsub.f32 %v321, %v353
      %v386 = vsub.f32 %v322, %v354
      %v387 = vsub.f32 %v323, %v355
      %v388 = vsub.f32 %v324, %v356
      %v389 = vsub.f32 %v325, %v357
      %v390 = vsub.f32 %v326, %v358
      %v391 = vsub.f32 %v327, %v359
      %v392 = vsub.f32 %v328, %v360
      %v393 = vsub.f32 %v329, %v361
      %v394 = vsub.f32 %v330, %v362
      %v395 = vsub.f32 %v331, %v363
      %v396 = vsub.f32 %v332, %v364
      %v397 = vsub.f32 %v333, %v365
      %v398 = vsub.f32 %v334, %v366
      %v399 = vsub.f32 %v335, %v367
      %v400 = vsub.f32 %v336, %v368
      %v401 = vsub.f32 %v337, %v369
      %v402 = vsub.f32 %v338, %v370
      %v403 = vsub.f32 %v339, %v371
      %v404 = vsub.f32 %v340, %v372
      %v405 = vsub.f32 %v341, %v373
      %v406 = vsub.f32 %v342, %v374
      %v407 = vsub.f32 %v343, %v375
      %v408 = vsub.f32 %v344, %v376
      %v409 = vsub.f32 %v345, %v377
      %v410 = vsub.f32 %v346, %v378
      %v411 = vsub.f32 %v347, %v379
      %v412 = vsub.f32 %v348, %v380
      %v413 = vsub.f32 %v349, %v381
      %v414 = vsub.f32 %v350, %v382
      %v415 = vsub.f32 %v351, %v383
      %v416 = vsub.f32 %v352, %v384
      %v417 = vmul.f32 %v385, %v385
      %v418 = vmul.f32 %v386, %v386
      %v419 = vmul.f32 %v387, %v387
      %v420 = vmul.f32 %v388, %v388
      %v421 = vmul.f32 %v389, %v389
      %v422 = vmul.f32 %v390, %v390
      %v423 = vmul.f32 %v391, %v391
      %v424 = vmul.f32 %v392, %v392
      %v425 = vmul.f32 %v393, %v393
      %v426 = vmul.f32 %v394, %v394
      %v427 = vmul.f32 %v395, %v395
      %v428 = vmul.f32 %v396, %v396
      %v429 = vmul.f32 %v397, %v397
      %v430 = vmul.f32 %v398, %v398
      %v431 = vmul.f32 %v399, %v399
      %v432 = vmul.f32 %v400, %v400
      %v433 = vmul.f32 %v401, %v401
      %v434 = vmul.f32 %v402, %v402
      %v435 = vmul.f32 %v403, %v403
      %v436 = vmul.f32 %v404, %v404
      %v437 = vmul.f32 %v405, %v405
      %v438 = vmul.f32 %v406, %v406
      %v439 = vmul.f32 %v407, %v407
      %v440 = vmul.f32 %v408, %v408
      %v441 = vmul.f32 %v409, %v409
      %v442 = vmul.f32 %v410, %v410
      %v443 = vmul.f32 %v411, %v411
      %v444 = vmul.f32 %v412, %v412
      %v445 = vmul.f32 %v413, %v413
      %v446 = vmul.f32 %v414, %v414
      %v447 = vmul.f32 %v415, %v415
      %v448 = vmul.f32 %v416, %v416
      %v449 = vld [vmem:[%s311] sm:$0xff]
      %v451 = vlaneseq
      %v452 = vshrl.u32 %v451, 7
      %v453 = vsub.s32 0, %v452
      %v454 = vrot.slane %v449, %v453
      %v455 = vlaneseq
      %v456 = vshrl.u32 %v455, 7
      %v457 = vsub.s32 1, %v456
      %v458 = vrot.slane %v449, %v457
      %v459 = vlaneseq
      %v460 = vshrl.u32 %v459, 7
      %v461 = vsub.s32 2, %v460
      %v462 = vrot.slane %v449, %v461
      %v463 = vlaneseq
      %v464 = vshrl.u32 %v463, 7
      %v465 = vsub.s32 3, %v464
      %v466 = vrot.slane %v449, %v465
      %v467 = vlaneseq
      %v468 = vshrl.u32 %v467, 7
      %v469 = vsub.s32 4, %v468
      %v470 = vrot.slane %v449, %v469
      %v471 = vlaneseq
      %v472 = vshrl.u32 %v471, 7
      %v473 = vsub.s32 5, %v472
      %v474 = vrot.slane %v449, %v473
      %v475 = vlaneseq
      %v476 = vshrl.u32 %v475, 7
      %v477 = vsub.s32 6, %v476
      %v478 = vrot.slane %v449, %v477
      %v479 = vlaneseq
      %v480 = vshrl.u32 %v479, 7
      %v481 = vsub.s32 7, %v480
      %v482 = vrot.slane %v449, %v481
      %v491 = vmul.f32 %v417, %v454
      %v492 = vmul.f32 %v418, %v458
      %v493 = vmul.f32 %v419, %v462
      %v494 = vmul.f32 %v420, %v466
      %v495 = vmul.f32 %v421, %v470
      %v496 = vmul.f32 %v422, %v474
      %v497 = vmul.f32 %v423, %v478
      %v498 = vmul.f32 %v424, %v482
      %v499 = vmul.f32 %v425, %v454
      %v500 = vmul.f32 %v426, %v458
      %v501 = vmul.f32 %v427, %v462
      %v502 = vmul.f32 %v428, %v466
      %v503 = vmul.f32 %v429, %v470
      %v504 = vmul.f32 %v430, %v474
      %v505 = vmul.f32 %v431, %v478
      %v506 = vmul.f32 %v432, %v482
      %v507 = vmul.f32 %v433, %v454
      %v508 = vmul.f32 %v434, %v458
      %v509 = vmul.f32 %v435, %v462
      %v510 = vmul.f32 %v436, %v466
      %v511 = vmul.f32 %v437, %v470
      %v512 = vmul.f32 %v438, %v474
      %v513 = vmul.f32 %v439, %v478
      %v514 = vmul.f32 %v440, %v482
      %v515 = vmul.f32 %v441, %v454
      %v516 = vmul.f32 %v442, %v458
      %v517 = vmul.f32 %v443, %v462
      %v518 = vmul.f32 %v444, %v466
      %v519 = vmul.f32 %v445, %v470
      %v520 = vmul.f32 %v446, %v474
      %v521 = vmul.f32 %v447, %v478
      %v522 = vmul.f32 %v448, %v482
      %v523 = vadd.f32 %v491, %v492
      %v524 = vadd.f32 %v523, %v493
      %v525 = vadd.f32 %v524, %v494
      %v526 = vadd.f32 %v525, %v495
      %v527 = vadd.f32 %v526, %v496
      %v528 = vadd.f32 %v527, %v497
      %v529 = vadd.f32 %v528, %v498
      %v530 = vadd.f32 %v529, %v499
      %v531 = vadd.f32 %v530, %v500
      %v532 = vadd.f32 %v531, %v501
      %v533 = vadd.f32 %v532, %v502
      %v534 = vadd.f32 %v533, %v503
      %v535 = vadd.f32 %v534, %v504
      %v536 = vadd.f32 %v535, %v505
      %v537 = vadd.f32 %v536, %v506
      %v538 = vadd.f32 %v537, %v507
      %v539 = vadd.f32 %v538, %v508
      %v540 = vadd.f32 %v539, %v509
      %v541 = vadd.f32 %v540, %v510
      %v542 = vadd.f32 %v541, %v511
      %v543 = vadd.f32 %v542, %v512
      %v544 = vadd.f32 %v543, %v513
      %v545 = vadd.f32 %v544, %v514
      %v546 = vadd.f32 %v545, %v515
      %v547 = vadd.f32 %v546, %v516
      %v548 = vadd.f32 %v547, %v517
      %v549 = vadd.f32 %v548, %v518
      %v550 = vadd.f32 %v549, %v519
      %v551 = vadd.f32 %v550, %v520
      %v552 = vadd.f32 %v551, %v521
      %v553 = vadd.f32 %v552, %v522
      %554 = vadd.xlane.f32.xlu0 %v553
      %v555 = vpop.xlane.xlu0 %554
      %v556 = vrot.slane %v555, 4
      %v557 = vadd.f32 %v555, %v556
      %v558 = vrot.slane %v557, 2
      %v559 = vadd.f32 %v557, %v558
      %v560 = vrot.slane %v559, 1
      %v561 = vadd.f32 %v559, %v560
      %s562 = vtos %v561
      %v563 = vstv %s562
      %564 = vst [vmem:[%s318] sm:$0xff] %v563
      %s565 = sadd.s32 %s19, %s20
      %s566 = sadd.s32 %s565, %s21
      %p567 = scmp.lt.s32.totalorder %s566, 1
      %s568 = scalar_select %p567, %s566, 1
      %s569 = smul.addr %s568, 8
      %s570 = scalar_lea.vmem %s3, %s569
      // Predicated region
      $region33: #{_loss_fn.4} parent=31 // pred_check
        %p571 = pneg %p143
      $region34: #{_loss_fn.4} parent=31 // pred_check_branch
        %573 = sbr.rel (%p571) target = $region36
      $region35: #{_loss_fn.4} parent=31 // pred_region
        %s574 = sadd.s32 %s19, %s20
        %s575 = sadd.s32 %s574, %s21
      $region36: #{_loss_fn.4} parent=31 // pred_fallthru
        _
    $region32: #{_loss_fn.4} parent=5 // pred_fallthru
      _
    %p576 = scmp.le.s32.totalorder 2, %s9
    // Predicated region
    $region37: #{_loss_fn.4} parent=5 // pred_check
      %p577 = pneg %p576
    $region38: #{_loss_fn.4} parent=5 // pred_check_branch
      %579 = sbr.rel (%p577) target = $region40
    $region39: #{_loss_fn.4} parent=5 // pred_region
      %s580 = ssub.s32 %s9, 2
      // Predicated region
      $region41: #{_loss_fn.4} parent=39 // pred_check
        %p581 = pneg %p149
      $region42: #{_loss_fn.4} parent=39 // pred_check_branch
        %583 = sbr.rel (%p581) target = $region44
      $region43: #{_loss_fn.4} parent=39 // pred_region
        %s584 = sadd.s32 %s22, %s23
        %s585 = sadd.s32 %s584, %s24
        %p586 = scmp.lt.s32.totalorder %s585, 1
        %s587 = scalar_select %p586, %s585, 1
        %s588 = smul.addr %s587, 8
        %s589 = scalar_lea.vmem %s3, %s588
      $region44: #{_loss_fn.4} parent=39 // pred_fallthru
        _
    $region40: #{_loss_fn.4} parent=5 // pred_fallthru
      _
  $region6: #{_loss_fn.4} parent=0 // loop_footer
    %s13 = sadd.s32 1, %s9
  $region7: #{_loss_fn.4} parent=0 // loop_footer_branch
    %8 = sbr.rel target = $region3
  $region8: #{_loss_fn.4} parent=0 // loop_exit
    _

// kernel: _loss_fn.5
$region0: #{_loss_fn.5}
  #allocation0 [shape = 'u32[]', space=smem, size = 0x4, offset = 0x4, fixed_abs, tag = 'smem constant byte address 0x4 - core index']
  #allocation1 [shape = 'u32[144,128]{1,0:T(1,128)}', space=vmem, size = 0x12000, scoped, tag = 'internal scratch']
  %s0 = inlined_call_operand.vmem [shape: f32[2,12,1600], index: 0, kind: input, shape index: {}]
  %s1 = inlined_call_operand.vmem [shape: f32[2,12,1600], index: 1, kind: input, shape index: {}]
  %s2 = inlined_call_operand.vmem [shape: f32[2,1,1600], index: 2, kind: input, shape index: {}]
  %s3 = inlined_call_operand.vmem [shape: f32[2,8,128], index: 3, kind: output, shape index: {}]
  %s4 = sld [smem:[#allocation0]]
  $region45: #{_loss_fn.5} parent=0
    _
  %s6 = ssub.s32 1, %s4
  %s7 = scalar_select 0, %s6, %s4
  loop: start=0, step=1, limit=4
  $region2: #{_loss_fn.5} parent=0 // loop_pre_header
    _
  $region3: #{_loss_fn.5} parent=0 // loop_header
    %s9 = sphi 0, %s13
    %p10 = scmp.ge.s32.totalorder %s9, 4
    %s16 = sphi 0, %s35
    %s17 = sphi 0, %s31
    %s18 = sphi 0, %s27
    %s19 = sphi 0, %s16
    %s20 = sphi 0, %s17
    %s21 = sphi 0, %s18
    %s22 = sphi 0, %s19
    %s23 = sphi 0, %s20
    %s24 = sphi 0, %s21
    %s42 = sphi 0, %s44
    %s45 = sphi 0, %s42
    %s46 = sphi 0, %s45
    %s62 = sphi 0, %s46
    %s72 = sphi 0, %s74
    %s75 = sphi 0, %s72
    %s76 = sphi 0, %s75
    %s92 = sphi 0, %s76
    %s100 = sphi 0, %s102
    %s103 = sphi 0, %s100
    %s104 = sphi 0, %s103
    %s120 = sphi 0, %s104
    %s130 = sphi 0, %s132
    %s133 = sphi 0, %s130
    %s134 = sphi 0, %s133
    %s150 = sphi 0, %s134
  $region4: #{_loss_fn.5} parent=0 // loop_header_branch
    %12 = sbr.rel (%p10) target = $region8
  $region5: #{_loss_fn.5} parent=0 // loop_body
    %s14 = ssub.s32 %s9, 1
    %s15 = ssub.s32 %s9, 2
    %s25 = sadd.s32 1, %s18
    %p26 = scmp.ge.s32.totalorder %s25, 1
    %s27 = scalar_select %p26, 0, %s25
    %s28 = sadd.s32 1, %s17
    %s29 = scalar_select %p26, %s28, %s17
    %p30 = scmp.ge.s32.totalorder %s29, 1
    %s31 = scalar_select %p30, 0, %s29
    %s32 = sadd.s32 1, %s16
    %s33 = scalar_select %p30, %s32, %s16
    %p34 = scmp.ge.s32.totalorder %s33, 2
    %s35 = scalar_select %p34, 0, %s33
    %s36 = ssub.s32 %s16, %s35
    %s37 = ssub.s32 %s18, %s27
    %s38 = sor.u32 %s36, %s37
    %s39 = ssub.s32 %s17, %s31
    %s40 = sor.u32 %s38, %s39
    %p41 = scmp.eq.s32.totalorder %s40, 0
    %s43 = sadd.s32 %s42, 1
    %s44 = scalar_select %p41, %s42, %s43
    %p47 = pneg %p41
    %p48 = scmp.eq.s32.totalorder %s9, 1
    %p49 = por %p47, %p48
    %p50 = scmp.ne.s32.totalorder %s42, %s45
    %p51 = scmp.eq.s32.totalorder %s9, 0
    %p52 = por %p50, %p51
    %p53 = scmp.ne.s32.totalorder %s42, %s45
    %p54 = scmp.eq.s32.totalorder %s14, 1
    %p55 = por %p53, %p54
    %p56 = scmp.ne.s32.totalorder %s45, %s46
    %p57 = scmp.eq.s32.totalorder %s14, 0
    %p58 = por %p56, %p57
    %p59 = scmp.ne.s32.totalorder %s45, %s46
    %p60 = scmp.eq.s32.totalorder %s15, 1
    %p61 = por %p59, %p60
    %p63 = scmp.ne.s32.totalorder %s46, %s62
    %p64 = scmp.eq.s32.totalorder %s15, 0
    %p65 = por %p63, %p64
    %s66 = ssub.s32 %s16, %s35
    %s67 = ssub.s32 %s18, %s27
    %s68 = sor.u32 %s66, %s67
    %s69 = ssub.s32 %s17, %s31
    %s70 = sor.u32 %s68, %s69
    %p71 = scmp.eq.s32.totalorder %s70, 0
    %s73 = sadd.s32 %s72, 1
    %s74 = scalar_select %p71, %s72, %s73
    %p77 = pneg %p71
    %p78 = scmp.eq.s32.totalorder %s9, 1
    %p79 = por %p77, %p78
    %p80 = scmp.ne.s32.totalorder %s72, %s75
    %p81 = scmp.eq.s32.totalorder %s9, 0
    %p82 = por %p80, %p81
    %p83 = scmp.ne.s32.totalorder %s72, %s75
    %p84 = scmp.eq.s32.totalorder %s14, 1
    %p85 = por %p83, %p84
    %p86 = scmp.ne.s32.totalorder %s75, %s76
    %p87 = scmp.eq.s32.totalorder %s14, 0
    %p88 = por %p86, %p87
    %p89 = scmp.ne.s32.totalorder %s75, %s76
    %p90 = scmp.eq.s32.totalorder %s15, 1
    %p91 = por %p89, %p90
    %p93 = scmp.ne.s32.totalorder %s76, %s92
    %p94 = scmp.eq.s32.totalorder %s15, 0
    %p95 = por %p93, %p94
    %s96 = ssub.s32 %s16, %s35
    %s97 = ssub.s32 %s17, %s31
    %s98 = sor.u32 %s96, %s97
    %p99 = scmp.eq.s32.totalorder %s98, 0
    %s101 = sadd.s32 %s100, 1
    %s102 = scalar_select %p99, %s100, %s101
    %p105 = pneg %p99
    %p106 = scmp.eq.s32.totalorder %s9, 1
    %p107 = por %p105, %p106
    %p108 = scmp.ne.s32.totalorder %s100, %s103
    %p109 = scmp.eq.s32.totalorder %s9, 0
    %p110 = por %p108, %p109
    %p111 = scmp.ne.s32.totalorder %s100, %s103
    %p112 = scmp.eq.s32.totalorder %s14, 1
    %p113 = por %p111, %p112
    %p114 = scmp.ne.s32.totalorder %s103, %s104
    %p115 = scmp.eq.s32.totalorder %s14, 0
    %p116 = por %p114, %p115
    %p117 = scmp.ne.s32.totalorder %s103, %s104
    %p118 = scmp.eq.s32.totalorder %s15, 1
    %p119 = por %p117, %p118
    %p121 = scmp.ne.s32.totalorder %s104, %s120
    %p122 = scmp.eq.s32.totalorder %s15, 0
    %p123 = por %p121, %p122
    %s124 = sadd.s32 %s16, %s17
    %s125 = sadd.s32 %s124, %s18
    %s126 = sadd.s32 %s35, %s31
    %s127 = sadd.s32 %s126, %s27
    %s128 = ssub.s32 %s125, %s127
    %p129 = scmp.eq.s32.totalorder %s128, 0
    %s131 = sadd.s32 %s130, 1
    %s132 = scalar_select %p129, %s130, %s131
    %p135 = pneg %p129
    %p136 = scmp.eq.s32.totalorder %s9, 1
    %p137 = por %p135, %p136
    %p138 = scmp.ne.s32.totalorder %s130, %s133
    %p139 = scmp.eq.s32.totalorder %s9, 0
    %p140 = por %p138, %p139
    %p141 = scmp.ne.s32.totalorder %s130, %s133
    %p142 = scmp.eq.s32.totalorder %s14, 1
    %p143 = por %p141, %p142
    %p144 = scmp.ne.s32.totalorder %s133, %s134
    %p145 = scmp.eq.s32.totalorder %s14, 0
    %p146 = por %p144, %p145
    %p147 = scmp.ne.s32.totalorder %s133, %s134
    %p148 = scmp.eq.s32.totalorder %s15, 1
    %p149 = por %p147, %p148
    %p151 = scmp.ne.s32.totalorder %s134, %s150
    %p152 = scmp.eq.s32.totalorder %s15, 0
    %p153 = por %p151, %p152
    %p154 = scmp.le.s32.totalorder 1, %s9
    %p155 = scmp.lt.s32.totalorder %s9, 3
    %p156 = pnand %p154, %p155
    %p157 = pneg %p156
    // Predicated region
    $region9: #{_loss_fn.5} parent=5 // pred_check
      _
    $region10: #{_loss_fn.5} parent=5 // pred_check_branch
      %159 = sbr.rel (%p156) target = $region12
    $region11: #{_loss_fn.5} parent=5 // pred_region
      %s160 = ssub.s32 %s9, 1
    $region12: #{_loss_fn.5} parent=5 // pred_fallthru
      _
    %p161 = scmp.lt.s32.totalorder %s9, 2
    // Predicated region
    $region13: #{_loss_fn.5} parent=5 // pred_check
      %p162 = pneg %p161
    $region14: #{_loss_fn.5} parent=5 // pred_check_branch
      %164 = sbr.rel (%p162) target = $region16
    $region15: #{_loss_fn.5} parent=5 // pred_region
      // Predicated region
      $region17: #{_loss_fn.5} parent=15 // pred_check
        %p165 = pneg %p52
      $region18: #{_loss_fn.5} parent=15 // pred_check_branch
        %167 = sbr.rel (%p165) target = $region20
      $region19: #{_loss_fn.5} parent=15 // pred_region
        %s168 = smul.u32 2, %s18
        %s169 = smul.u32 13, %s17
        %p170 = scmp.lt.s32.totalorder %s16, 1
        %s171 = scalar_select %p170, %s16, 1
        %p172 = scmp.lt.s32.totalorder %s168, 1
        %s173 = scalar_select %p172, %s168, 1
        %p174 = scmp.lt.s32.totalorder %s169, 12
        %s175 = scalar_select %p174, %s169, 12
        %s176 = smul.addr %s173, 13
        %s177 = sadd.s32 %s175, %s176
        %s178 = smul.addr %s171, 26
        %s179 = sadd.s32 %s177, %s178
        %s180 = smul.addr %s179, 8
        %s181 = scalar_lea.vmem %s0, %s180
        %s182 = smul.u32 2, %s18
        %s183 = smul.u32 13, %s17
      $region20: #{_loss_fn.5} parent=15 // pred_fallthru
        _
      // Predicated region
      $region21: #{_loss_fn.5} parent=15 // pred_check
        %p184 = pneg %p82
      $region22: #{_loss_fn.5} parent=15 // pred_check_branch
        %186 = sbr.rel (%p184) target = $region24
      $region23: #{_loss_fn.5} parent=15 // pred_region
        %s187 = smul.u32 2, %s18
        %s188 = smul.u32 13, %s17
        %p189 = scmp.lt.s32.totalorder %s16, 1
        %s190 = scalar_select %p189, %s16, 1
        %p191 = scmp.lt.s32.totalorder %s187, 1
        %s192 = scalar_select %p191, %s187, 1
        %p193 = scmp.lt.s32.totalorder %s188, 12
        %s194 = scalar_select %p193, %s188, 12
        %s195 = smul.addr %s192, 13
        %s196 = sadd.s32 %s194, %s195
        %s197 = smul.addr %s190, 26
        %s198 = sadd.s32 %s196, %s197
        %s199 = smul.addr %s198, 8
        %s200 = scalar_lea.vmem %s1, %s199
        %s201 = smul.u32 2, %s18
        %s202 = smul.u32 13, %s17
      $region24: #{_loss_fn.5} parent=15 // pred_fallthru
        _
      // Predicated region
      $region25: #{_loss_fn.5} parent=15 // pred_check
        %p203 = pneg %p110
      $region26: #{_loss_fn.5} parent=15 // pred_check_branch
        %205 = sbr.rel (%p203) target = $region28
      $region27: #{_loss_fn.5} parent=15 // pred_region
        %s206 = smul.u32 13, %s17
        %p207 = scmp.lt.s32.totalorder %s16, 1
        %s208 = scalar_select %p207, %s16, 1
        %p209 = scmp.lt.s32.totalorder %s206, 12
        %s210 = scalar_select %p209, %s206, 12
        %s211 = smul.addr %s208, 13
        %s212 = sadd.s32 %s210, %s211
        %s213 = scalar_lea.vmem %s2, %s212
        %s214 = smul.u32 13, %s17
      $region28: #{_loss_fn.5} parent=15 // pred_fallthru
        _
    $region16: #{_loss_fn.5} parent=5 // pred_fallthru
      _
    %p215 = scmp.le.s32.totalorder 1, %s9
    %p216 = scmp.lt.s32.totalorder %s9, 3
    %p217 = pnand %p215, %p216
    %p218 = pneg %p217
    // Predicated region
    $region29: #{_loss_fn.5} parent=5 // pred_check
      _
    $region30: #{_loss_fn.5} parent=5 // pred_check_branch
      %220 = sbr.rel (%p217) target = $region32
    $region31: #{_loss_fn.5} parent=5 // pred_region
      %s221 = ssub.s32 %s9, 1
      %s222 = smul.u32 2, %s21
      %s223 = smul.u32 13, %s20
      %p224 = scmp.lt.s32.totalorder %s19, 1
      %s225 = scalar_select %p224, %s19, 1
      %p226 = scmp.lt.s32.totalorder %s222, 1
      %s227 = scalar_select %p226, %s222, 1
      %p228 = scmp.lt.s32.totalorder %s223, 12
      %s229 = scalar_select %p228, %s223, 12
      %s230 = smul.addr %s227, 13
      %s231 = sadd.s32 %s229, %s230
      %s232 = smul.addr %s225, 26
      %s233 = sadd.s32 %s231, %s232
      %s234 = smul.addr %s233, 8
      %s235 = scalar_lea.vmem %s0, %s234
      %p236 = pneg %p58
      %p237 = pneg %p55
      %s238 = smul.u32 2, %s21
      %s239 = smul.u32 13, %s20
      %p240 = scmp.lt.s32.totalorder %s19, 1
      %s241 = scalar_select %p240, %s19, 1
      %p242 = scmp.lt.s32.totalorder %s238, 1
      %s243 = scalar_select %p242, %s238, 1
      %p244 = scmp.lt.s32.totalorder %s239, 12
      %s245 = scalar_select %p244, %s239, 12
      %s246 = smul.addr %s243, 13
      %s247 = sadd.s32 %s245, %s246
      %s248 = smul.addr %s241, 26
      %s249 = sadd.s32 %s247, %s248
      %s250 = smul.addr %s249, 8
      %s251 = scalar_lea.vmem %s1, %s250
      %p252 = pneg %p88
      %p253 = pneg %p85
      %s254 = smul.u32 13, %s20
      %p255 = scmp.lt.s32.totalorder %s19, 1
      %s256 = scalar_select %p255, %s19, 1
      %p257 = scmp.lt.s32.totalorder %s254, 12
      %s258 = scalar_select %p257, %s254, 12
      %s259 = smul.addr %s256, 13
      %s260 = sadd.s32 %s258, %s259
      %s261 = scalar_lea.vmem %s2, %s260
      %p262 = pneg %p116
      %p263 = pneg %p113
      %p264 = pneg %p146
      %p265 = pneg %p143
      %s266 = sadd.s32 %s19, %s20
      %s267 = sadd.s32 %s266, %s21
      %p268 = scmp.lt.s32.totalorder %s267, 1
      %s269 = scalar_select %p268, %s267, 1
      %s270 = smul.addr %s269, 8
      %s271 = scalar_lea.vmem %s3, %s270
      %s272 = smul.u32 2, %s21
      %s273 = smul.u32 13, %s20
      %p274 = scmp.lt.s32.totalorder %s19, 1
      %s275 = scalar_select %p274, %s19, 1
      %p276 = scmp.lt.s32.totalorder %s272, 1
      %s277 = scalar_select %p276, %s272, 1
      %p278 = scmp.lt.s32.totalorder %s273, 12
      %s279 = scalar_select %p278, %s273, 12
      %s280 = smul.addr %s277, 13
      %s281 = sadd.s32 %s279, %s280
      %s282 = smul.addr %s275, 26
      %s283 = sadd.s32 %s281, %s282
      %s284 = smul.addr %s283, 8
      %s285 = scalar_lea.vmem %s0, %s284
      %s286 = smul.u32 2, %s21
      %s287 = smul.u32 13, %s20
      %s288 = smul.u32 2, %s21
      %s289 = smul.u32 13, %s20
      %p290 = scmp.lt.s32.totalorder %s19, 1
      %s291 = scalar_select %p290, %s19, 1
      %p292 = scmp.lt.s32.totalorder %s288, 1
      %s293 = scalar_select %p292, %s288, 1
      %p294 = scmp.lt.s32.totalorder %s289, 12
      %s295 = scalar_select %p294, %s289, 12
      %s296 = smul.addr %s293, 13
      %s297 = sadd.s32 %s295, %s296
      %s298 = smul.addr %s291, 26
      %s299 = sadd.s32 %s297, %s298
      %s300 = smul.addr %s299, 8
      %s301 = scalar_lea.vmem %s1, %s300
      %s302 = smul.u32 2, %s21
      %s303 = smul.u32 13, %s20
      %s304 = smul.u32 13, %s20
      %p305 = scmp.lt.s32.totalorder %s19, 1
      %s306 = scalar_select %p305, %s19, 1
      %p307 = scmp.lt.s32.totalorder %s304, 12
      %s308 = scalar_select %p307, %s304, 12
      %s309 = smul.addr %s306, 13
      %s310 = sadd.s32 %s308, %s309
      %s311 = scalar_lea.vmem %s2, %s310
      %s312 = smul.u32 13, %s20
      %s313 = sadd.s32 %s19, %s20
      %s314 = sadd.s32 %s313, %s21
      %p315 = scmp.lt.s32.totalorder %s314, 1
      %s316 = scalar_select %p315, %s314, 1
      %s317 = smul.addr %s316, 8
      %s318 = scalar_lea.vmem %s3, %s317
      %s319 = sadd.s32 %s19, %s20
      %s320 = sadd.s32 %s319, %s21
      %v321 = vld [vmem:[%s285] sm:$0xff]
      %v322 = vld [vmem:[%s285 + $0x8] sm:$0xff]
      %v323 = vld [vmem:[%s285 + $0x10] sm:$0xff]
      %v324 = vld [vmem:[%s285 + $0x18] sm:$0xff]
      %v325 = vld [vmem:[%s285 + $0x20] sm:$0xff]
      %v326 = vld [vmem:[%s285 + $0x28] sm:$0xff]
      %v327 = vld [vmem:[%s285 + $0x30] sm:$0xff]
      %v328 = vld [vmem:[%s285 + $0x38] sm:$0xff]
      %v329 = vld [vmem:[%s285 + $0x40] sm:$0xff]
      %v330 = vld [vmem:[%s285 + $0x48] sm:$0xff]
      %v331 = vld [vmem:[%s285 + $0x50] sm:$0xff]
      %v332 = vld [vmem:[%s285 + $0x58] sm:$0xff]
      %v333 = vld [vmem:[%s285 + $0x60] sm:$0xff]
      %v334 = vld [vmem:[%s285 + $0x68] sm:$0xf]
      %v335 = vld [vmem:[%s285 + $0x70] sm:$0xf]
      %v336 = vld [vmem:[%s285 + $0x78] sm:$0xf]
      %v337 = vld [vmem:[%s285 + $0x80] sm:$0xf]
      %v338 = vld [vmem:[%s285 + $0x88] sm:$0xf]
      %v339 = vld [vmem:[%s285 + $0x90] sm:$0xf]
      %v340 = vld [vmem:[%s285 + $0x98] sm:$0xf]
      %v341 = vld [vmem:[%s285 + $0xa0] sm:$0xf]
      %v342 = vld [vmem:[%s285 + $0xa8] sm:$0xf]
      %v343 = vld [vmem:[%s285 + $0xb0] sm:$0xf]
      %v344 = vld [vmem:[%s285 + $0xb8] sm:$0xf]
      %v345 = vld [vmem:[%s285 + $0xc0] sm:$0xf]
      %v346 = vld [vmem:[%s285 + $0xc8] sm:$0xf]
      %v347 = vld [vmem:[%s301] sm:$0xff]
      %v348 = vld [vmem:[%s301 + $0x8] sm:$0xff]
      %v349 = vld [vmem:[%s301 + $0x10] sm:$0xff]
      %v350 = vld [vmem:[%s301 + $0x18] sm:$0xff]
      %v351 = vld [vmem:[%s301 + $0x20] sm:$0xff]
      %v352 = vld [vmem:[%s301 + $0x28] sm:$0xff]
      %v353 = vld [vmem:[%s301 + $0x30] sm:$0xff]
      %v354 = vld [vmem:[%s301 + $0x38] sm:$0xff]
      %v355 = vld [vmem:[%s301 + $0x40] sm:$0xff]
      %v356 = vld [vmem:[%s301 + $0x48] sm:$0xff]
      %v357 = vld [vmem:[%s301 + $0x50] sm:$0xff]
      %v358 = vld [vmem:[%s301 + $0x58] sm:$0xff]
      %v359 = vld [vmem:[%s301 + $0x60] sm:$0xff]
      %v360 = vld [vmem:[%s301 + $0x68] sm:$0xf]
      %v361 = vld [vmem:[%s301 + $0x70] sm:$0xf]
      %v362 = vld [vmem:[%s301 + $0x78] sm:$0xf]
      %v363 = vld [vmem:[%s301 + $0x80] sm:$0xf]
      %v364 = vld [vmem:[%s301 + $0x88] sm:$0xf]
      %v365 = vld [vmem:[%s301 + $0x90] sm:$0xf]
      %v366 = vld [vmem:[%s301 + $0x98] sm:$0xf]
      %v367 = vld [vmem:[%s301 + $0xa0] sm:$0xf]
      %v368 = vld [vmem:[%s301 + $0xa8] sm:$0xf]
      %v369 = vld [vmem:[%s301 + $0xb0] sm:$0xf]
      %v370 = vld [vmem:[%s301 + $0xb8] sm:$0xf]
      %v371 = vld [vmem:[%s301 + $0xc0] sm:$0xf]
      %v372 = vld [vmem:[%s301 + $0xc8] sm:$0xf]
      %v373 = vsub.f32 %v321, %v347
      %v374 = vsub.f32 %v322, %v348
      %v375 = vsub.f32 %v323, %v349
      %v376 = vsub.f32 %v324, %v350
      %v377 = vsub.f32 %v325, %v351
      %v378 = vsub.f32 %v326, %v352
      %v379 = vsub.f32 %v327, %v353
      %v380 = vsub.f32 %v328, %v354
      %v381 = vsub.f32 %v329, %v355
      %v382 = vsub.f32 %v330, %v356
      %v383 = vsub.f32 %v331, %v357
      %v384 = vsub.f32 %v332, %v358
      %v385 = vsub.f32 %v333, %v359
      %v386 = vsub.f32 %v334, %v360
      %v387 = vsub.f32 %v335, %v361
      %v388 = vsub.f32 %v336, %v362
      %v389 = vsub.f32 %v337, %v363
      %v390 = vsub.f32 %v338, %v364
      %v391 = vsub.f32 %v339, %v365
      %v392 = vsub.f32 %v340, %v366
      %v393 = vsub.f32 %v341, %v367
      %v394 = vsub.f32 %v342, %v368
      %v395 = vsub.f32 %v343, %v369
      %v396 = vsub.f32 %v344, %v370
      %v397 = vsub.f32 %v345, %v371
      %v398 = vsub.f32 %v346, %v372
      %v399 = vmul.f32 %v373, %v373
      %v400 = vmul.f32 %v374, %v374
      %v401 = vmul.f32 %v375, %v375
      %v402 = vmul.f32 %v376, %v376
      %v403 = vmul.f32 %v377, %v377
      %v404 = vmul.f32 %v378, %v378
      %v405 = vmul.f32 %v379, %v379
      %v406 = vmul.f32 %v380, %v380
      %v407 = vmul.f32 %v381, %v381
      %v408 = vmul.f32 %v382, %v382
      %v409 = vmul.f32 %v383, %v383
      %v410 = vmul.f32 %v384, %v384
      %v411 = vmul.f32 %v385, %v385
      %v412 = vmul.f32 %v386, %v386
      %v413 = vmul.f32 %v387, %v387
      %v414 = vmul.f32 %v388, %v388
      %v415 = vmul.f32 %v389, %v389
      %v416 = vmul.f32 %v390, %v390
      %v417 = vmul.f32 %v391, %v391
      %v418 = vmul.f32 %v392, %v392
      %v419 = vmul.f32 %v393, %v393
      %v420 = vmul.f32 %v394, %v394
      %v421 = vmul.f32 %v395, %v395
      %v422 = vmul.f32 %v396, %v396
      %v423 = vmul.f32 %v397, %v397
      %v424 = vmul.f32 %v398, %v398
      %v425 = vld [vmem:[%s311] sm:$0xff]
      %v426 = vld [vmem:[%s311 + $0x8] sm:$0x1f]
      %v429 = vlaneseq
      %v430 = vshrl.u32 %v429, 7
      %v431 = vsub.s32 0, %v430
      %v432 = vrot.slane %v425, %v431
      %v433 = vlaneseq
      %v434 = vshrl.u32 %v433, 7
      %v435 = vsub.s32 1, %v434
      %v436 = vrot.slane %v425, %v435
      %v437 = vlaneseq
      %v438 = vshrl.u32 %v437, 7
      %v439 = vsub.s32 2, %v438
      %v440 = vrot.slane %v425, %v439
      %v441 = vlaneseq
      %v442 = vshrl.u32 %v441, 7
      %v443 = vsub.s32 3, %v442
      %v444 = vrot.slane %v425, %v443
      %v445 = vlaneseq
      %v446 = vshrl.u32 %v445, 7
      %v447 = vsub.s32 4, %v446
      %v448 = vrot.slane %v425, %v447
      %v449 = vlaneseq
      %v450 = vshrl.u32 %v449, 7
      %v451 = vsub.s32 5, %v450
      %v452 = vrot.slane %v425, %v451
      %v453 = vlaneseq
      %v454 = vshrl.u32 %v453, 7
      %v455 = vsub.s32 6, %v454
      %v456 = vrot.slane %v425, %v455
      %v457 = vlaneseq
      %v458 = vshrl.u32 %v457, 7
      %v459 = vsub.s32 7, %v458
      %v460 = vrot.slane %v425, %v459
      %v461 = vlaneseq
      %v462 = vshrl.u32 %v461, 7
      %v463 = vsub.s32 0, %v462
      %v464 = vrot.slane %v426, %v463
      %v465 = vlaneseq
      %v466 = vshrl.u32 %v465, 7
      %v467 = vsub.s32 1, %v466
      %v468 = vrot.slane %v426, %v467
      %v469 = vlaneseq
      %v470 = vshrl.u32 %v469, 7
      %v471 = vsub.s32 2, %v470
      %v472 = vrot.slane %v426, %v471
      %v473 = vlaneseq
      %v474 = vshrl.u32 %v473, 7
      %v475 = vsub.s32 3, %v474
      %v476 = vrot.slane %v426, %v475
      %v477 = vlaneseq
      %v478 = vshrl.u32 %v477, 7
      %v479 = vsub.s32 4, %v478
      %v480 = vrot.slane %v426, %v479
      %v494 = vmul.f32 %v399, %v432
      %v495 = vmul.f32 %v400, %v436
      %v496 = vmul.f32 %v401, %v440
      %v497 = vmul.f32 %v402, %v444
      %v498 = vmul.f32 %v403, %v448
      %v499 = vmul.f32 %v404, %v452
      %v500 = vmul.f32 %v405, %v456
      %v501 = vmul.f32 %v406, %v460
      %v502 = vmul.f32 %v407, %v464
      %v503 = vmul.f32 %v408, %v468
      %v504 = vmul.f32 %v409, %v472
      %v505 = vmul.f32 %v410, %v476
      %v506 = vmul.f32 %v411, %v480
      %v507 = vmul.f32 %v412, %v432
      %v508 = vmul.f32 %v413, %v436
      %v509 = vmul.f32 %v414, %v440
      %v510 = vmul.f32 %v415, %v444
      %v511 = vmul.f32 %v416, %v448
      %v512 = vmul.f32 %v417, %v452
      %v513 = vmul.f32 %v418, %v456
      %v514 = vmul.f32 %v419, %v460
      %v515 = vmul.f32 %v420, %v464
      %v516 = vmul.f32 %v421, %v468
      %v517 = vmul.f32 %v422, %v472
      %v518 = vmul.f32 %v423, %v476
      %v519 = vmul.f32 %v424, %v480
      %v520 = vadd.f32 %v494, %v495
      %v521 = vadd.f32 %v520, %v496
      %v522 = vadd.f32 %v521, %v497
      %v523 = vadd.f32 %v522, %v498
      %v524 = vadd.f32 %v523, %v499
      %v525 = vadd.f32 %v524, %v500
      %v526 = vadd.f32 %v525, %v501
      %v527 = vadd.f32 %v526, %v502
      %v528 = vadd.f32 %v527, %v503
      %v529 = vadd.f32 %v528, %v504
      %v530 = vadd.f32 %v529, %v505
      %vm531 = vcmask 523264
      %v532 = vsel %vm531, %v506, 0.0
      %v533 = vadd.f32 %v530, %v532
      %vm534 = vcmask 1043456
      %v535 = vsel %vm534, %v507, 0.0
      %v536 = vadd.f32 %v533, %v535
      %v537 = vsel %vm534, %v508, 0.0
      %v538 = vadd.f32 %v536, %v537
      %v539 = vsel %vm534, %v509, 0.0
      %v540 = vadd.f32 %v538, %v539
      %v541 = vsel %vm534, %v510, 0.0
      %v542 = vadd.f32 %v540, %v541
      %v543 = vsel %vm534, %v511, 0.0
      %v544 = vadd.f32 %v542, %v543
      %v545 = vsel %vm534, %v512, 0.0
      %v546 = vadd.f32 %v544, %v545
      %v547 = vsel %vm534, %v513, 0.0
      %v548 = vadd.f32 %v546, %v547
      %v549 = vsel %vm534, %v514, 0.0
      %v550 = vadd.f32 %v548, %v549
      %v551 = vsel %vm534, %v515, 0.0
      %v552 = vadd.f32 %v550, %v551
      %v553 = vsel %vm534, %v516, 0.0
      %v554 = vadd.f32 %v552, %v553
      %v555 = vsel %vm534, %v517, 0.0
      %v556 = vadd.f32 %v554, %v555
      %v557 = vsel %vm534, %v518, 0.0
      %v558 = vadd.f32 %v556, %v557
      %vm559 = vcmask 519168
      %v560 = vsel %vm559, %v519, 0.0
      %v561 = vadd.f32 %v558, %v560
      %562 = vadd.xlane.f32.xlu0 %v561
      %v563 = vpop.xlane.xlu0 %562
      %v564 = vrot.slane %v563, 4
      %v565 = vadd.f32 %v563, %v564
      %v566 = vrot.slane %v565, 2
      %v567 = vadd.f32 %v565, %v566
      %v568 = vrot.slane %v567, 1
      %v569 = vadd.f32 %v567, %v568
      %s570 = vtos %v569
      %v571 = vstv %s570
      %572 = vst [vmem:[%s318] sm:$0xff] %v571
      %s573 = sadd.s32 %s19, %s20
      %s574 = sadd.s32 %s573, %s21
      %p575 = scmp.lt.s32.totalorder %s574, 1
      %s576 = scalar_select %p575, %s574, 1
      %s577 = smul.addr %s576, 8
      %s578 = scalar_lea.vmem %s3, %s577
      // Predicated region
      $region33: #{_loss_fn.5} parent=31 // pred_check
        %p579 = pneg %p143
      $region34: #{_loss_fn.5} parent=31 // pred_check_branch
        %581 = sbr.rel (%p579) target = $region36
      $region35: #{_loss_fn.5} parent=31 // pred_region
        %s582 = sadd.s32 %s19, %s20
        %s583 = sadd.s32 %s582, %s21
      $region36: #{_loss_fn.5} parent=31 // pred_fallthru
        _
    $region32: #{_loss_fn.5} parent=5 // pred_fallthru
      _
    %p584 = scmp.le.s32.totalorder 2, %s9
    // Predicated region
    $region37: #{_loss_fn.5} parent=5 // pred_check
      %p585 = pneg %p584
    $region38: #{_loss_fn.5} parent=5 // pred_check_branch
      %587 = sbr.rel (%p585) target = $region40
    $region39: #{_loss_fn.5} parent=5 // pred_region
      %s588 = ssub.s32 %s9, 2
      // Predicated region
      $region41: #{_loss_fn.5} parent=39 // pred_check
        %p589 = pneg %p149
      $region42: #{_loss_fn.5} parent=39 // pred_check_branch
        %591 = sbr.rel (%p589) target = $region44
      $region43: #{_loss_fn.5} parent=39 // pred_region
        %s592 = sadd.s32 %s22, %s23
        %s593 = sadd.s32 %s592, %s24
        %p594 = scmp.lt.s32.totalorder %s593, 1
        %s595 = scalar_select %p594, %s593, 1
        %s596 = smul.addr %s595, 8
        %s597 = scalar_lea.vmem %s3, %s596
      $region44: #{_loss_fn.5} parent=39 // pred_fallthru
        _
    $region40: #{_loss_fn.5} parent=5 // pred_fallthru
      _
  $region6: #{_loss_fn.5} parent=0 // loop_footer
    %s13 = sadd.s32 1, %s9
  $region7: #{_loss_fn.5} parent=0 // loop_footer_branch
    %8 = sbr.rel target = $region3
  $region8: #{_loss_fn.5} parent=0 // loop_exit
    _

// kernel: _loss_fn.3
$region0: #{_loss_fn.3}
  #allocation0 [shape = 'u32[]', space=smem, size = 0x4, offset = 0x4, fixed_abs, tag = 'smem constant byte address 0x4 - core index']
  #allocation1 [shape = 'u32[144,128]{1,0:T(1,128)}', space=vmem, size = 0x12000, scoped, tag = 'internal scratch']
  %s0 = inlined_call_operand.vmem [shape: f32[2,16,4096], index: 0, kind: input, shape index: {}]
  %s1 = inlined_call_operand.vmem [shape: f32[2,16,4096], index: 1, kind: input, shape index: {}]
  %s2 = inlined_call_operand.vmem [shape: f32[2,1,4096], index: 2, kind: input, shape index: {}]
  %s3 = inlined_call_operand.vmem [shape: f32[2,8,128], index: 3, kind: output, shape index: {}]
  %s4 = sld [smem:[#allocation0]]
  $region45: #{_loss_fn.3} parent=0
    _
  %s6 = ssub.s32 1, %s4
  %s7 = scalar_select 0, %s6, %s4
  loop: start=0, step=1, limit=4
  $region2: #{_loss_fn.3} parent=0 // loop_pre_header
    _
  $region3: #{_loss_fn.3} parent=0 // loop_header
    %s9 = sphi 0, %s13
    %p10 = scmp.ge.s32.totalorder %s9, 4
    %s16 = sphi 0, %s35
    %s17 = sphi 0, %s31
    %s18 = sphi 0, %s27
    %s19 = sphi 0, %s16
    %s20 = sphi 0, %s17
    %s21 = sphi 0, %s18
    %s22 = sphi 0, %s19
    %s23 = sphi 0, %s20
    %s24 = sphi 0, %s21
    %s42 = sphi 0, %s44
    %s45 = sphi 0, %s42
    %s46 = sphi 0, %s45
    %s62 = sphi 0, %s46
    %s72 = sphi 0, %s74
    %s75 = sphi 0, %s72
    %s76 = sphi 0, %s75
    %s92 = sphi 0, %s76
    %s100 = sphi 0, %s102
    %s103 = sphi 0, %s100
    %s104 = sphi 0, %s103
    %s120 = sphi 0, %s104
    %s130 = sphi 0, %s132
    %s133 = sphi 0, %s130
    %s134 = sphi 0, %s133
    %s150 = sphi 0, %s134
  $region4: #{_loss_fn.3} parent=0 // loop_header_branch
    %12 = sbr.rel (%p10) target = $region8
  $region5: #{_loss_fn.3} parent=0 // loop_body
    %s14 = ssub.s32 %s9, 1
    %s15 = ssub.s32 %s9, 2
    %s25 = sadd.s32 1, %s18
    %p26 = scmp.ge.s32.totalorder %s25, 1
    %s27 = scalar_select %p26, 0, %s25
    %s28 = sadd.s32 1, %s17
    %s29 = scalar_select %p26, %s28, %s17
    %p30 = scmp.ge.s32.totalorder %s29, 1
    %s31 = scalar_select %p30, 0, %s29
    %s32 = sadd.s32 1, %s16
    %s33 = scalar_select %p30, %s32, %s16
    %p34 = scmp.ge.s32.totalorder %s33, 2
    %s35 = scalar_select %p34, 0, %s33
    %s36 = ssub.s32 %s16, %s35
    %s37 = ssub.s32 %s18, %s27
    %s38 = sor.u32 %s36, %s37
    %s39 = ssub.s32 %s17, %s31
    %s40 = sor.u32 %s38, %s39
    %p41 = scmp.eq.s32.totalorder %s40, 0
    %s43 = sadd.s32 %s42, 1
    %s44 = scalar_select %p41, %s42, %s43
    %p47 = pneg %p41
    %p48 = scmp.eq.s32.totalorder %s9, 1
    %p49 = por %p47, %p48
    %p50 = scmp.ne.s32.totalorder %s42, %s45
    %p51 = scmp.eq.s32.totalorder %s9, 0
    %p52 = por %p50, %p51
    %p53 = scmp.ne.s32.totalorder %s42, %s45
    %p54 = scmp.eq.s32.totalorder %s14, 1
    %p55 = por %p53, %p54
    %p56 = scmp.ne.s32.totalorder %s45, %s46
    %p57 = scmp.eq.s32.totalorder %s14, 0
    %p58 = por %p56, %p57
    %p59 = scmp.ne.s32.totalorder %s45, %s46
    %p60 = scmp.eq.s32.totalorder %s15, 1
    %p61 = por %p59, %p60
    %p63 = scmp.ne.s32.totalorder %s46, %s62
    %p64 = scmp.eq.s32.totalorder %s15, 0
    %p65 = por %p63, %p64
    %s66 = ssub.s32 %s16, %s35
    %s67 = ssub.s32 %s18, %s27
    %s68 = sor.u32 %s66, %s67
    %s69 = ssub.s32 %s17, %s31
    %s70 = sor.u32 %s68, %s69
    %p71 = scmp.eq.s32.totalorder %s70, 0
    %s73 = sadd.s32 %s72, 1
    %s74 = scalar_select %p71, %s72, %s73
    %p77 = pneg %p71
    %p78 = scmp.eq.s32.totalorder %s9, 1
    %p79 = por %p77, %p78
    %p80 = scmp.ne.s32.totalorder %s72, %s75
    %p81 = scmp.eq.s32.totalorder %s9, 0
    %p82 = por %p80, %p81
    %p83 = scmp.ne.s32.totalorder %s72, %s75
    %p84 = scmp.eq.s32.totalorder %s14, 1
    %p85 = por %p83, %p84
    %p86 = scmp.ne.s32.totalorder %s75, %s76
    %p87 = scmp.eq.s32.totalorder %s14, 0
    %p88 = por %p86, %p87
    %p89 = scmp.ne.s32.totalorder %s75, %s76
    %p90 = scmp.eq.s32.totalorder %s15, 1
    %p91 = por %p89, %p90
    %p93 = scmp.ne.s32.totalorder %s76, %s92
    %p94 = scmp.eq.s32.totalorder %s15, 0
    %p95 = por %p93, %p94
    %s96 = ssub.s32 %s16, %s35
    %s97 = ssub.s32 %s17, %s31
    %s98 = sor.u32 %s96, %s97
    %p99 = scmp.eq.s32.totalorder %s98, 0
    %s101 = sadd.s32 %s100, 1
    %s102 = scalar_select %p99, %s100, %s101
    %p105 = pneg %p99
    %p106 = scmp.eq.s32.totalorder %s9, 1
    %p107 = por %p105, %p106
    %p108 = scmp.ne.s32.totalorder %s100, %s103
    %p109 = scmp.eq.s32.totalorder %s9, 0
    %p110 = por %p108, %p109
    %p111 = scmp.ne.s32.totalorder %s100, %s103
    %p112 = scmp.eq.s32.totalorder %s14, 1
    %p113 = por %p111, %p112
    %p114 = scmp.ne.s32.totalorder %s103, %s104
    %p115 = scmp.eq.s32.totalorder %s14, 0
    %p116 = por %p114, %p115
    %p117 = scmp.ne.s32.totalorder %s103, %s104
    %p118 = scmp.eq.s32.totalorder %s15, 1
    %p119 = por %p117, %p118
    %p121 = scmp.ne.s32.totalorder %s104, %s120
    %p122 = scmp.eq.s32.totalorder %s15, 0
    %p123 = por %p121, %p122
    %s124 = sadd.s32 %s16, %s17
    %s125 = sadd.s32 %s124, %s18
    %s126 = sadd.s32 %s35, %s31
    %s127 = sadd.s32 %s126, %s27
    %s128 = ssub.s32 %s125, %s127
    %p129 = scmp.eq.s32.totalorder %s128, 0
    %s131 = sadd.s32 %s130, 1
    %s132 = scalar_select %p129, %s130, %s131
    %p135 = pneg %p129
    %p136 = scmp.eq.s32.totalorder %s9, 1
    %p137 = por %p135, %p136
    %p138 = scmp.ne.s32.totalorder %s130, %s133
    %p139 = scmp.eq.s32.totalorder %s9, 0
    %p140 = por %p138, %p139
    %p141 = scmp.ne.s32.totalorder %s130, %s133
    %p142 = scmp.eq.s32.totalorder %s14, 1
    %p143 = por %p141, %p142
    %p144 = scmp.ne.s32.totalorder %s133, %s134
    %p145 = scmp.eq.s32.totalorder %s14, 0
    %p146 = por %p144, %p145
    %p147 = scmp.ne.s32.totalorder %s133, %s134
    %p148 = scmp.eq.s32.totalorder %s15, 1
    %p149 = por %p147, %p148
    %p151 = scmp.ne.s32.totalorder %s134, %s150
    %p152 = scmp.eq.s32.totalorder %s15, 0
    %p153 = por %p151, %p152
    %p154 = scmp.le.s32.totalorder 1, %s9
    %p155 = scmp.lt.s32.totalorder %s9, 3
    %p156 = pnand %p154, %p155
    %p157 = pneg %p156
    // Predicated region
    $region9: #{_loss_fn.3} parent=5 // pred_check
      _
    $region10: #{_loss_fn.3} parent=5 // pred_check_branch
      %159 = sbr.rel (%p156) target = $region12
    $region11: #{_loss_fn.3} parent=5 // pred_region
      %s160 = ssub.s32 %s9, 1
    $region12: #{_loss_fn.3} parent=5 // pred_fallthru
      _
    %p161 = scmp.lt.s32.totalorder %s9, 2
    // Predicated region
    $region13: #{_loss_fn.3} parent=5 // pred_check
      %p162 = pneg %p161
    $region14: #{_loss_fn.3} parent=5 // pred_check_branch
      %164 = sbr.rel (%p162) target = $region16
    $region15: #{_loss_fn.3} parent=5 // pred_region
      // Predicated region
      $region17: #{_loss_fn.3} parent=15 // pred_check
        %p165 = pneg %p52
      $region18: #{_loss_fn.3} parent=15 // pred_check_branch
        %167 = sbr.rel (%p165) target = $region20
      $region19: #{_loss_fn.3} parent=15 // pred_region
        %s168 = smul.u32 2, %s18
        %s169 = smul.u32 32, %s17
        %p170 = scmp.lt.s32.totalorder %s16, 1
        %s171 = scalar_select %p170, %s16, 1
        %p172 = scmp.lt.s32.totalorder %s168, 1
        %s173 = scalar_select %p172, %s168, 1
        %p174 = scmp.lt.s32.totalorder %s169, 31
        %s175 = scalar_select %p174, %s169, 31
        %s176 = smul.addr %s173, 32
        %s177 = sadd.s32 %s175, %s176
        %s178 = smul.addr %s171, 64
        %s179 = sadd.s32 %s177, %s178
        %s180 = smul.addr %s179, 8
        %s181 = scalar_lea.vmem %s0, %s180
        %s182 = smul.u32 2, %s18
        %s183 = smul.u32 32, %s17
      $region20: #{_loss_fn.3} parent=15 // pred_fallthru
        _
      // Predicated region
      $region21: #{_loss_fn.3} parent=15 // pred_check
        %p184 = pneg %p82
      $region22: #{_loss_fn.3} parent=15 // pred_check_branch
        %186 = sbr.rel (%p184) target = $region24
      $region23: #{_loss_fn.3} parent=15 // pred_region
        %s187 = smul.u32 2, %s18
        %s188 = smul.u32 32, %s17
        %p189 = scmp.lt.s32.totalorder %s16, 1
        %s190 = scalar_select %p189, %s16, 1
        %p191 = scmp.lt.s32.totalorder %s187, 1
        %s192 = scalar_select %p191, %s187, 1
        %p193 = scmp.lt.s32.totalorder %s188, 31
        %s194 = scalar_select %p193, %s188, 31
        %s195 = smul.addr %s192, 32
        %s196 = sadd.s32 %s194, %s195
        %s197 = smul.addr %s190, 64
        %s198 = sadd.s32 %s196, %s197
        %s199 = smul.addr %s198, 8
        %s200 = scalar_lea.vmem %s1, %s199
        %s201 = smul.u32 2, %s18
        %s202 = smul.u32 32, %s17
      $region24: #{_loss_fn.3} parent=15 // pred_fallthru
        _
      // Predicated region
      $region25: #{_loss_fn.3} parent=15 // pred_check
        %p203 = pneg %p110
      $region26: #{_loss_fn.3} parent=15 // pred_check_branch
        %205 = sbr.rel (%p203) target = $region28
      $region27: #{_loss_fn.3} parent=15 // pred_region
        %s206 = smul.u32 32, %s17
        %p207 = scmp.lt.s32.totalorder %s16, 1
        %s208 = scalar_select %p207, %s16, 1
        %p209 = scmp.lt.s32.totalorder %s206, 31
        %s210 = scalar_select %p209, %s206, 31
        %s211 = smul.addr %s208, 32
        %s212 = sadd.s32 %s210, %s211
        %s213 = scalar_lea.vmem %s2, %s212
        %s214 = smul.u32 32, %s17
      $region28: #{_loss_fn.3} parent=15 // pred_fallthru
        _
    $region16: #{_loss_fn.3} parent=5 // pred_fallthru
      _
    %p215 = scmp.le.s32.totalorder 1, %s9
    %p216 = scmp.lt.s32.totalorder %s9, 3
    %p217 = pnand %p215, %p216
    %p218 = pneg %p217
    // Predicated region
    $region29: #{_loss_fn.3} parent=5 // pred_check
      _
    $region30: #{_loss_fn.3} parent=5 // pred_check_branch
      %220 = sbr.rel (%p217) target = $region32
    $region31: #{_loss_fn.3} parent=5 // pred_region
      %s221 = ssub.s32 %s9, 1
      %s222 = smul.u32 2, %s21
      %s223 = smul.u32 32, %s20
      %p224 = scmp.lt.s32.totalorder %s19, 1
      %s225 = scalar_select %p224, %s19, 1
      %p226 = scmp.lt.s32.totalorder %s222, 1
      %s227 = scalar_select %p226, %s222, 1
      %p228 = scmp.lt.s32.totalorder %s223, 31
      %s229 = scalar_select %p228, %s223, 31
      %s230 = smul.addr %s227, 32
      %s231 = sadd.s32 %s229, %s230
      %s232 = smul.addr %s225, 64
      %s233 = sadd.s32 %s231, %s232
      %s234 = smul.addr %s233, 8
      %s235 = scalar_lea.vmem %s0, %s234
      %p236 = pneg %p58
      %p237 = pneg %p55
      %s238 = smul.u32 2, %s21
      %s239 = smul.u32 32, %s20
      %p240 = scmp.lt.s32.totalorder %s19, 1
      %s241 = scalar_select %p240, %s19, 1
      %p242 = scmp.lt.s32.totalorder %s238, 1
      %s243 = scalar_select %p242, %s238, 1
      %p244 = scmp.lt.s32.totalorder %s239, 31
      %s245 = scalar_select %p244, %s239, 31
      %s246 = smul.addr %s243, 32
      %s247 = sadd.s32 %s245, %s246
      %s248 = smul.addr %s241, 64
      %s249 = sadd.s32 %s247, %s248
      %s250 = smul.addr %s249, 8
      %s251 = scalar_lea.vmem %s1, %s250
      %p252 = pneg %p88
      %p253 = pneg %p85
      %s254 = smul.u32 32, %s20
      %p255 = scmp.lt.s32.totalorder %s19, 1
      %s256 = scalar_select %p255, %s19, 1
      %p257 = scmp.lt.s32.totalorder %s254, 31
      %s258 = scalar_select %p257, %s254, 31
      %s259 = smul.addr %s256, 32
      %s260 = sadd.s32 %s258, %s259
      %s261 = scalar_lea.vmem %s2, %s260
      %p262 = pneg %p116
      %p263 = pneg %p113
      %p264 = pneg %p146
      %p265 = pneg %p143
      %s266 = sadd.s32 %s19, %s20
      %s267 = sadd.s32 %s266, %s21
      %p268 = scmp.lt.s32.totalorder %s267, 1
      %s269 = scalar_select %p268, %s267, 1
      %s270 = smul.addr %s269, 8
      %s271 = scalar_lea.vmem %s3, %s270
      %s272 = smul.u32 2, %s21
      %s273 = smul.u32 32, %s20
      %p274 = scmp.lt.s32.totalorder %s19, 1
      %s275 = scalar_select %p274, %s19, 1
      %p276 = scmp.lt.s32.totalorder %s272, 1
      %s277 = scalar_select %p276, %s272, 1
      %p278 = scmp.lt.s32.totalorder %s273, 31
      %s279 = scalar_select %p278, %s273, 31
      %s280 = smul.addr %s277, 32
      %s281 = sadd.s32 %s279, %s280
      %s282 = smul.addr %s275, 64
      %s283 = sadd.s32 %s281, %s282
      %s284 = smul.addr %s283, 8
      %s285 = scalar_lea.vmem %s0, %s284
      %s286 = smul.u32 2, %s21
      %s287 = smul.u32 32, %s20
      %s288 = smul.u32 2, %s21
      %s289 = smul.u32 32, %s20
      %p290 = scmp.lt.s32.totalorder %s19, 1
      %s291 = scalar_select %p290, %s19, 1
      %p292 = scmp.lt.s32.totalorder %s288, 1
      %s293 = scalar_select %p292, %s288, 1
      %p294 = scmp.lt.s32.totalorder %s289, 31
      %s295 = scalar_select %p294, %s289, 31
      %s296 = smul.addr %s293, 32
      %s297 = sadd.s32 %s295, %s296
      %s298 = smul.addr %s291, 64
      %s299 = sadd.s32 %s297, %s298
      %s300 = smul.addr %s299, 8
      %s301 = scalar_lea.vmem %s1, %s300
      %s302 = smul.u32 2, %s21
      %s303 = smul.u32 32, %s20
      %s304 = smul.u32 32, %s20
      %p305 = scmp.lt.s32.totalorder %s19, 1
      %s306 = scalar_select %p305, %s19, 1
      %p307 = scmp.lt.s32.totalorder %s304, 31
      %s308 = scalar_select %p307, %s304, 31
      %s309 = smul.addr %s306, 32
      %s310 = sadd.s32 %s308, %s309
      %s311 = scalar_lea.vmem %s2, %s310
      %s312 = smul.u32 32, %s20
      %s313 = sadd.s32 %s19, %s20
      %s314 = sadd.s32 %s313, %s21
      %p315 = scmp.lt.s32.totalorder %s314, 1
      %s316 = scalar_select %p315, %s314, 1
      %s317 = smul.addr %s316, 8
      %s318 = scalar_lea.vmem %s3, %s317
      %s319 = sadd.s32 %s19, %s20
      %s320 = sadd.s32 %s319, %s21
      %v321 = vld [vmem:[%s285] sm:$0xff]
      %v322 = vld [vmem:[%s285 + $0x8] sm:$0xff]
      %v323 = vld [vmem:[%s285 + $0x10] sm:$0xff]
      %v324 = vld [vmem:[%s285 + $0x18] sm:$0xff]
      %v325 = vld [vmem:[%s285 + $0x20] sm:$0xff]
      %v326 = vld [vmem:[%s285 + $0x28] sm:$0xff]
      %v327 = vld [vmem:[%s285 + $0x30] sm:$0xff]
      %v328 = vld [vmem:[%s285 + $0x38] sm:$0xff]
      %v329 = vld [vmem:[%s285 + $0x40] sm:$0xff]
      %v330 = vld [vmem:[%s285 + $0x48] sm:$0xff]
      %v331 = vld [vmem:[%s285 + $0x50] sm:$0xff]
      %v332 = vld [vmem:[%s285 + $0x58] sm:$0xff]
      %v333 = vld [vmem:[%s285 + $0x60] sm:$0xff]
      %v334 = vld [vmem:[%s285 + $0x68] sm:$0xff]
      %v335 = vld [vmem:[%s285 + $0x70] sm:$0xff]
      %v336 = vld [vmem:[%s285 + $0x78] sm:$0xff]
      %v337 = vld [vmem:[%s285 + $0x80] sm:$0xff]
      %v338 = vld [vmem:[%s285 + $0x88] sm:$0xff]
      %v339 = vld [vmem:[%s285 + $0x90] sm:$0xff]
      %v340 = vld [vmem:[%s285 + $0x98] sm:$0xff]
      %v341 = vld [vmem:[%s285 + $0xa0] sm:$0xff]
      %v342 = vld [vmem:[%s285 + $0xa8] sm:$0xff]
      %v343 = vld [vmem:[%s285 + $0xb0] sm:$0xff]
      %v344 = vld [vmem:[%s285 + $0xb8] sm:$0xff]
      %v345 = vld [vmem:[%s285 + $0xc0] sm:$0xff]
      %v346 = vld [vmem:[%s285 + $0xc8] sm:$0xff]
      %v347 = vld [vmem:[%s285 + $0xd0] sm:$0xff]
      %v348 = vld [vmem:[%s285 + $0xd8] sm:$0xff]
      %v349 = vld [vmem:[%s285 + $0xe0] sm:$0xff]
      %v350 = vld [vmem:[%s285 + $0xe8] sm:$0xff]
      %v351 = vld [vmem:[%s285 + $0xf0] sm:$0xff]
      %v352 = vld [vmem:[%s285 + $0xf8] sm:$0xff]
      %v353 = vld [vmem:[%s285 + $0x100] sm:$0xff]
      %v354 = vld [vmem:[%s285 + $0x108] sm:$0xff]
      %v355 = vld [vmem:[%s285 + $0x110] sm:$0xff]
      %v356 = vld [vmem:[%s285 + $0x118] sm:$0xff]
      %v357 = vld [vmem:[%s285 + $0x120] sm:$0xff]
      %v358 = vld [vmem:[%s285 + $0x128] sm:$0xff]
      %v359 = vld [vmem:[%s285 + $0x130] sm:$0xff]
      %v360 = vld [vmem:[%s285 + $0x138] sm:$0xff]
      %v361 = vld [vmem:[%s285 + $0x140] sm:$0xff]
      %v362 = vld [vmem:[%s285 + $0x148] sm:$0xff]
      %v363 = vld [vmem:[%s285 + $0x150] sm:$0xff]
      %v364 = vld [vmem:[%s285 + $0x158] sm:$0xff]
      %v365 = vld [vmem:[%s285 + $0x160] sm:$0xff]
      %v366 = vld [vmem:[%s285 + $0x168] sm:$0xff]
      %v367 = vld [vmem:[%s285 + $0x170] sm:$0xff]
      %v368 = vld [vmem:[%s285 + $0x178] sm:$0xff]
      %v369 = vld [vmem:[%s285 + $0x180] sm:$0xff]
      %v370 = vld [vmem:[%s285 + $0x188] sm:$0xff]
      %v371 = vld [vmem:[%s285 + $0x190] sm:$0xff]
      %v372 = vld [vmem:[%s285 + $0x198] sm:$0xff]
      %v373 = vld [vmem:[%s285 + $0x1a0] sm:$0xff]
      %v374 = vld [vmem:[%s285 + $0x1a8] sm:$0xff]
      %v375 = vld [vmem:[%s285 + $0x1b0] sm:$0xff]
      %v376 = vld [vmem:[%s285 + $0x1b8] sm:$0xff]
      %v377 = vld [vmem:[%s285 + $0x1c0] sm:$0xff]
      %v378 = vld [vmem:[%s285 + $0x1c8] sm:$0xff]
      %v379 = vld [vmem:[%s285 + $0x1d0] sm:$0xff]
      %v380 = vld [vmem:[%s285 + $0x1d8] sm:$0xff]
      %v381 = vld [vmem:[%s285 + $0x1e0] sm:$0xff]
      %v382 = vld [vmem:[%s285 + $0x1e8] sm:$0xff]
      %v383 = vld [vmem:[%s285 + $0x1f0] sm:$0xff]
      %v384 = vld [vmem:[%s285 + $0x1f8] sm:$0xff]
      %v385 = vld [vmem:[%s301] sm:$0xff]
      %v386 = vld [vmem:[%s301 + $0x8] sm:$0xff]
      %v387 = vld [vmem:[%s301 + $0x10] sm:$0xff]
      %v388 = vld [vmem:[%s301 + $0x18] sm:$0xff]
      %v389 = vld [vmem:[%s301 + $0x20] sm:$0xff]
      %v390 = vld [vmem:[%s301 + $0x28] sm:$0xff]
      %v391 = vld [vmem:[%s301 + $0x30] sm:$0xff]
      %v392 = vld [vmem:[%s301 + $0x38] sm:$0xff]
      %v393 = vld [vmem:[%s301 + $0x40] sm:$0xff]
      %v394 = vld [vmem:[%s301 + $0x48] sm:$0xff]
      %v395 = vld [vmem:[%s301 + $0x50] sm:$0xff]
      %v396 = vld [vmem:[%s301 + $0x58] sm:$0xff]
      %v397 = vld [vmem:[%s301 + $0x60] sm:$0xff]
      %v398 = vld [vmem:[%s301 + $0x68] sm:$0xff]
      %v399 = vld [vmem:[%s301 + $0x70] sm:$0xff]
      %v400 = vld [vmem:[%s301 + $0x78] sm:$0xff]
      %v401 = vld [vmem:[%s301 + $0x80] sm:$0xff]
      %v402 = vld [vmem:[%s301 + $0x88] sm:$0xff]
      %v403 = vld [vmem:[%s301 + $0x90] sm:$0xff]
      %v404 = vld [vmem:[%s301 + $0x98] sm:$0xff]
      %v405 = vld [vmem:[%s301 + $0xa0] sm:$0xff]
      %v406 = vld [vmem:[%s301 + $0xa8] sm:$0xff]
      %v407 = vld [vmem:[%s301 + $0xb0] sm:$0xff]
      %v408 = vld [vmem:[%s301 + $0xb8] sm:$0xff]
      %v409 = vld [vmem:[%s301 + $0xc0] sm:$0xff]
      %v410 = vld [vmem:[%s301 + $0xc8] sm:$0xff]
      %v411 = vld [vmem:[%s301 + $0xd0] sm:$0xff]
      %v412 = vld [vmem:[%s301 + $0xd8] sm:$0xff]
      %v413 = vld [vmem:[%s301 + $0xe0] sm:$0xff]
      %v414 = vld [vmem:[%s301 + $0xe8] sm:$0xff]
      %v415 = vld [vmem:[%s301 + $0xf0] sm:$0xff]
      %v416 = vld [vmem:[%s301 + $0xf8] sm:$0xff]
      %v417 = vld [vmem:[%s301 + $0x100] sm:$0xff]
      %v418 = vld [vmem:[%s301 + $0x108] sm:$0xff]
      %v419 = vld [vmem:[%s301 + $0x110] sm:$0xff]
      %v420 = vld [vmem:[%s301 + $0x118] sm:$0xff]
      %v421 = vld [vmem:[%s301 + $0x120] sm:$0xff]
      %v422 = vld [vmem:[%s301 + $0x128] sm:$0xff]
      %v423 = vld [vmem:[%s301 + $0x130] sm:$0xff]
      %v424 = vld [vmem:[%s301 + $0x138] sm:$0xff]
      %v425 = vld [vmem:[%s301 + $0x140] sm:$0xff]
      %v426 = vld [vmem:[%s301 + $0x148] sm:$0xff]
      %v427 = vld [vmem:[%s301 + $0x150] sm:$0xff]
      %v428 = vld [vmem:[%s301 + $0x158] sm:$0xff]
      %v429 = vld [vmem:[%s301 + $0x160] sm:$0xff]
      %v430 = vld [vmem:[%s301 + $0x168] sm:$0xff]
      %v431 = vld [vmem:[%s301 + $0x170] sm:$0xff]
      %v432 = vld [vmem:[%s301 + $0x178] sm:$0xff]
      %v433 = vld [vmem:[%s301 + $0x180] sm:$0xff]
      %v434 = vld [vmem:[%s301 + $0x188] sm:$0xff]
      %v435 = vld [vmem:[%s301 + $0x190] sm:$0xff]
      %v436 = vld [vmem:[%s301 + $0x198] sm:$0xff]
      %v437 = vld [vmem:[%s301 + $0x1a0] sm:$0xff]
      %v438 = vld [vmem:[%s301 + $0x1a8] sm:$0xff]
      %v439 = vld [vmem:[%s301 + $0x1b0] sm:$0xff]
      %v440 = vld [vmem:[%s301 + $0x1b8] sm:$0xff]
      %v441 = vld [vmem:[%s301 + $0x1c0] sm:$0xff]
      %v442 = vld [vmem:[%s301 + $0x1c8] sm:$0xff]
      %v443 = vld [vmem:[%s301 + $0x1d0] sm:$0xff]
      %v444 = vld [vmem:[%s301 + $0x1d8] sm:$0xff]
      %v445 = vld [vmem:[%s301 + $0x1e0] sm:$0xff]
      %v446 = vld [vmem:[%s301 + $0x1e8] sm:$0xff]
      %v447 = vld [vmem:[%s301 + $0x1f0] sm:$0xff]
      %v448 = vld [vmem:[%s301 + $0x1f8] sm:$0xff]
      %v449 = vsub.f32 %v321, %v385
      %v450 = vsub.f32 %v322, %v386
      %v451 = vsub.f32 %v323, %v387
      %v452 = vsub.f32 %v324, %v388
      %v453 = vsub.f32 %v325, %v389
      %v454 = vsub.f32 %v326, %v390
      %v455 = vsub.f32 %v327, %v391
      %v456 = vsub.f32 %v328, %v392
      %v457 = vsub.f32 %v329, %v393
      %v458 = vsub.f32 %v330, %v394
      %v459 = vsub.f32 %v331, %v395
      %v460 = vsub.f32 %v332, %v396
      %v461 = vsub.f32 %v333, %v397
      %v462 = vsub.f32 %v334, %v398
      %v463 = vsub.f32 %v335, %v399
      %v464 = vsub.f32 %v336, %v400
      %v465 = vsub.f32 %v337, %v401
      %v466 = vsub.f32 %v338, %v402
      %v467 = vsub.f32 %v339, %v403
      %v468 = vsub.f32 %v340, %v404
      %v469 = vsub.f32 %v341, %v405
      %v470 = vsub.f32 %v342, %v406
      %v471 = vsub.f32 %v343, %v407
      %v472 = vsub.f32 %v344, %v408
      %v473 = vsub.f32 %v345, %v409
      %v474 = vsub.f32 %v346, %v410
      %v475 = vsub.f32 %v347, %v411
      %v476 = vsub.f32 %v348, %v412
      %v477 = vsub.f32 %v349, %v413
      %v478 = vsub.f32 %v350, %v414
      %v479 = vsub.f32 %v351, %v415
      %v480 = vsub.f32 %v352, %v416
      %v481 = vsub.f32 %v353, %v417
      %v482 = vsub.f32 %v354, %v418
      %v483 = vsub.f32 %v355, %v419
      %v484 = vsub.f32 %v356, %v420
      %v485 = vsub.f32 %v357, %v421
      %v486 = vsub.f32 %v358, %v422
      %v487 = vsub.f32 %v359, %v423
      %v488 = vsub.f32 %v360, %v424
      %v489 = vsub.f32 %v361, %v425
      %v490 = vsub.f32 %v362, %v426
      %v491 = vsub.f32 %v363, %v427
      %v492 = vsub.f32 %v364, %v428
      %v493 = vsub.f32 %v365, %v429
      %v494 = vsub.f32 %v366, %v430
      %v495 = vsub.f32 %v367, %v431
      %v496 = vsub.f32 %v368, %v432
      %v497 = vsub.f32 %v369, %v433
      %v498 = vsub.f32 %v370, %v434
      %v499 = vsub.f32 %v371, %v435
      %v500 = vsub.f32 %v372, %v436
      %v501 = vsub.f32 %v373, %v437
      %v502 = vsub.f32 %v374, %v438
      %v503 = vsub.f32 %v375, %v439
      %v504 = vsub.f32 %v376, %v440
      %v505 = vsub.f32 %v377, %v441
      %v506 = vsub.f32 %v378, %v442
      %v507 = vsub.f32 %v379, %v443
      %v508 = vsub.f32 %v380, %v444
      %v509 = vsub.f32 %v381, %v445
      %v510 = vsub.f32 %v382, %v446
      %v511 = vsub.f32 %v383, %v447
      %v512 = vsub.f32 %v384, %v448
      %v513 = vmul.f32 %v449, %v449
      %v514 = vmul.f32 %v450, %v450
      %v515 = vmul.f32 %v451, %v451
      %v516 = vmul.f32 %v452, %v452
      %v517 = vmul.f32 %v453, %v453
      %v518 = vmul.f32 %v454, %v454
      %v519 = vmul.f32 %v455, %v455
      %v520 = vmul.f32 %v456, %v456
      %v521 = vmul.f32 %v457, %v457
      %v522 = vmul.f32 %v458, %v458
      %v523 = vmul.f32 %v459, %v459
      %v524 = vmul.f32 %v460, %v460
      %v525 = vmul.f32 %v461, %v461
      %v526 = vmul.f32 %v462, %v462
      %v527 = vmul.f32 %v463, %v463
      %v528 = vmul.f32 %v464, %v464
      %v529 = vmul.f32 %v465, %v465
      %v530 = vmul.f32 %v466, %v466
      %v531 = vmul.f32 %v467, %v467
      %v532 = vmul.f32 %v468, %v468
      %v533 = vmul.f32 %v469, %v469
      %v534 = vmul.f32 %v470, %v470
      %v535 = vmul.f32 %v471, %v471
      %v536 = vmul.f32 %v472, %v472
      %v537 = vmul.f32 %v473, %v473
      %v538 = vmul.f32 %v474, %v474
      %v539 = vmul.f32 %v475, %v475
      %v540 = vmul.f32 %v476, %v476
      %v541 = vmul.f32 %v477, %v477
      %v542 = vmul.f32 %v478, %v478
      %v543 = vmul.f32 %v479, %v479
      %v544 = vmul.f32 %v480, %v480
      %v545 = vmul.f32 %v481, %v481
      %v546 = vmul.f32 %v482, %v482
      %v547 = vmul.f32 %v483, %v483
      %v548 = vmul.f32 %v484, %v484
      %v549 = vmul.f32 %v485, %v485
      %v550 = vmul.f32 %v486, %v486
      %v551 = vmul.f32 %v487, %v487
      %v552 = vmul.f32 %v488, %v488
      %v553 = vmul.f32 %v489, %v489
      %v554 = vmul.f32 %v490, %v490
      %v555 = vmul.f32 %v491, %v491
      %v556 = vmul.f32 %v492, %v492
      %v557 = vmul.f32 %v493, %v493
      %v558 = vmul.f32 %v494, %v494
      %v559 = vmul.f32 %v495, %v495
      %v560 = vmul.f32 %v496, %v496
      %v561 = vmul.f32 %v497, %v497
      %v562 = vmul.f32 %v498, %v498
      %v563 = vmul.f32 %v499, %v499
      %v564 = vmul.f32 %v500, %v500
      %v565 = vmul.f32 %v501, %v501
      %v566 = vmul.f32 %v502, %v502
      %v567 = vmul.f32 %v503, %v503
      %v568 = vmul.f32 %v504, %v504
      %v569 = vmul.f32 %v505, %v505
      %v570 = vmul.f32 %v506, %v506
      %v571 = vmul.f32 %v507, %v507
      %v572 = vmul.f32 %v508, %v508
      %v573 = vmul.f32 %v509, %v509
      %v574 = vmul.f32 %v510, %v510
      %v575 = vmul.f32 %v511, %v511
      %v576 = vmul.f32 %v512, %v512
      %v577 = vld [vmem:[%s311] sm:$0xff]
      %v578 = vld [vmem:[%s311 + $0x8] sm:$0xff]
      %v579 = vld [vmem:[%s311 + $0x10] sm:$0xff]
      %v580 = vld [vmem:[%s311 + $0x18] sm:$0xff]
      %v585 = vlaneseq
      %v586 = vshrl.u32 %v585, 7
      %v587 = vsub.s32 0, %v586
      %v588 = vrot.slane %v577, %v587
      %v589 = vlaneseq
      %v590 = vshrl.u32 %v589, 7
      %v591 = vsub.s32 1, %v590
      %v592 = vrot.slane %v577, %v591
      %v593 = vlaneseq
      %v594 = vshrl.u32 %v593, 7
      %v595 = vsub.s32 2, %v594
      %v596 = vrot.slane %v577, %v595
      %v597 = vlaneseq
      %v598 = vshrl.u32 %v597, 7
      %v599 = vsub.s32 3, %v598
      %v600 = vrot.slane %v577, %v599
      %v601 = vlaneseq
      %v602 = vshrl.u32 %v601, 7
      %v603 = vsub.s32 4, %v602
      %v604 = vrot.slane %v577, %v603
      %v605 = vlaneseq
      %v606 = vshrl.u32 %v605, 7
      %v607 = vsub.s32 5, %v606
      %v608 = vrot.slane %v577, %v607
      %v609 = vlaneseq
      %v610 = vshrl.u32 %v609, 7
      %v611 = vsub.s32 6, %v610
      %v612 = vrot.slane %v577, %v611
      %v613 = vlaneseq
      %v614 = vshrl.u32 %v613, 7
      %v615 = vsub.s32 7, %v614
      %v616 = vrot.slane %v577, %v615
      %v617 = vlaneseq
      %v618 = vshrl.u32 %v617, 7
      %v619 = vsub.s32 0, %v618
      %v620 = vrot.slane %v578, %v619
      %v621 = vlaneseq
      %v622 = vshrl.u32 %v621, 7
      %v623 = vsub.s32 1, %v622
      %v624 = vrot.slane %v578, %v623
      %v625 = vlaneseq
      %v626 = vshrl.u32 %v625, 7
      %v627 = vsub.s32 2, %v626
      %v628 = vrot.slane %v578, %v627
      %v629 = vlaneseq
      %v630 = vshrl.u32 %v629, 7
      %v631 = vsub.s32 3, %v630
      %v632 = vrot.slane %v578, %v631
      %v633 = vlaneseq
      %v634 = vshrl.u32 %v633, 7
      %v635 = vsub.s32 4, %v634
      %v636 = vrot.slane %v578, %v635
      %v637 = vlaneseq
      %v638 = vshrl.u32 %v637, 7
      %v639 = vsub.s32 5, %v638
      %v640 = vrot.slane %v578, %v639
      %v641 = vlaneseq
      %v642 = vshrl.u32 %v641, 7
      %v643 = vsub.s32 6, %v642
      %v644 = vrot.slane %v578, %v643
      %v645 = vlaneseq
      %v646 = vshrl.u32 %v645, 7
      %v647 = vsub.s32 7, %v646
      %v648 = vrot.slane %v578, %v647
      %v649 = vlaneseq
      %v650 = vshrl.u32 %v649, 7
      %v651 = vsub.s32 0, %v650
      %v652 = vrot.slane %v579, %v651
      %v653 = vlaneseq
      %v654 = vshrl.u32 %v653, 7
      %v655 = vsub.s32 1, %v654
      %v656 = vrot.slane %v579, %v655
      %v657 = vlaneseq
      %v658 = vshrl.u32 %v657, 7
      %v659 = vsub.s32 2, %v658
      %v660 = vrot.slane %v579, %v659
      %v661 = vlaneseq
      %v662 = vshrl.u32 %v661, 7
      %v663 = vsub.s32 3, %v662
      %v664 = vrot.slane %v579, %v663
      %v665 = vlaneseq
      %v666 = vshrl.u32 %v665, 7
      %v667 = vsub.s32 4, %v666
      %v668 = vrot.slane %v579, %v667
      %v669 = vlaneseq
      %v670 = vshrl.u32 %v669, 7
      %v671 = vsub.s32 5, %v670
      %v672 = vrot.slane %v579, %v671
      %v673 = vlaneseq
      %v674 = vshrl.u32 %v673, 7
      %v675 = vsub.s32 6, %v674
      %v676 = vrot.slane %v579, %v675
      %v677 = vlaneseq
      %v678 = vshrl.u32 %v677, 7
      %v679 = vsub.s32 7, %v678
      %v680 = vrot.slane %v579, %v679
      %v681 = vlaneseq
      %v682 = vshrl.u32 %v681, 7
      %v683 = vsub.s32 0, %v682
      %v684 = vrot.slane %v580, %v683
      %v685 = vlaneseq
      %v686 = vshrl.u32 %v685, 7
      %v687 = vsub.s32 1, %v686
      %v688 = vrot.slane %v580, %v687
      %v689 = vlaneseq
      %v690 = vshrl.u32 %v689, 7
      %v691 = vsub.s32 2, %v690
      %v692 = vrot.slane %v580, %v691
      %v693 = vlaneseq
      %v694 = vshrl.u32 %v693, 7
      %v695 = vsub.s32 3, %v694
      %v696 = vrot.slane %v580, %v695
      %v697 = vlaneseq
      %v698 = vshrl.u32 %v697, 7
      %v699 = vsub.s32 4, %v698
      %v700 = vrot.slane %v580, %v699
      %v701 = vlaneseq
      %v702 = vshrl.u32 %v701, 7
      %v703 = vsub.s32 5, %v702
      %v704 = vrot.slane %v580, %v703
      %v705 = vlaneseq
      %v706 = vshrl.u32 %v705, 7
      %v707 = vsub.s32 6, %v706
      %v708 = vrot.slane %v580, %v707
      %v709 = vlaneseq
      %v710 = vshrl.u32 %v709, 7
      %v711 = vsub.s32 7, %v710
      %v712 = vrot.slane %v580, %v711
      %v745 = vmul.f32 %v513, %v588
      %v746 = vmul.f32 %v514, %v592
      %v747 = vmul.f32 %v515, %v596
      %v748 = vmul.f32 %v516, %v600
      %v749 = vmul.f32 %v517, %v604
      %v750 = vmul.f32 %v518, %v608
      %v751 = vmul.f32 %v519, %v612
      %v752 = vmul.f32 %v520, %v616
      %v753 = vmul.f32 %v521, %v620
      %v754 = vmul.f32 %v522, %v624
      %v755 = vmul.f32 %v523, %v628
      %v756 = vmul.f32 %v524, %v632
      %v757 = vmul.f32 %v525, %v636
      %v758 = vmul.f32 %v526, %v640
      %v759 = vmul.f32 %v527, %v644
      %v760 = vmul.f32 %v528, %v648
      %v761 = vmul.f32 %v529, %v652
      %v762 = vmul.f32 %v530, %v656
      %v763 = vmul.f32 %v531, %v660
      %v764 = vmul.f32 %v532, %v664
      %v765 = vmul.f32 %v533, %v668
      %v766 = vmul.f32 %v534, %v672
      %v767 = vmul.f32 %v535, %v676
      %v768 = vmul.f32 %v536, %v680
      %v769 = vmul.f32 %v537, %v684
      %v770 = vmul.f32 %v538, %v688
      %v771 = vmul.f32 %v539, %v692
      %v772 = vmul.f32 %v540, %v696
      %v773 = vmul.f32 %v541, %v700
      %v774 = vmul.f32 %v542, %v704
      %v775 = vmul.f32 %v543, %v708
      %v776 = vmul.f32 %v544, %v712
      %v777 = vmul.f32 %v545, %v588
      %v778 = vmul.f32 %v546, %v592
      %v779 = vmul.f32 %v547, %v596
      %v780 = vmul.f32 %v548, %v600
      %v781 = vmul.f32 %v549, %v604
      %v782 = vmul.f32 %v550, %v608
      %v783 = vmul.f32 %v551, %v612
      %v784 = vmul.f32 %v552, %v616
      %v785 = vmul.f32 %v553, %v620
      %v786 = vmul.f32 %v554, %v624
      %v787 = vmul.f32 %v555, %v628
      %v788 = vmul.f32 %v556, %v632
      %v789 = vmul.f32 %v557, %v636
      %v790 = vmul.f32 %v558, %v640
      %v791 = vmul.f32 %v559, %v644
      %v792 = vmul.f32 %v560, %v648
      %v793 = vmul.f32 %v561, %v652
      %v794 = vmul.f32 %v562, %v656
      %v795 = vmul.f32 %v563, %v660
      %v796 = vmul.f32 %v564, %v664
      %v797 = vmul.f32 %v565, %v668
      %v798 = vmul.f32 %v566, %v672
      %v799 = vmul.f32 %v567, %v676
      %v800 = vmul.f32 %v568, %v680
      %v801 = vmul.f32 %v569, %v684
      %v802 = vmul.f32 %v570, %v688
      %v803 = vmul.f32 %v571, %v692
      %v804 = vmul.f32 %v572, %v696
      %v805 = vmul.f32 %v573, %v700
      %v806 = vmul.f32 %v574, %v704
      %v807 = vmul.f32 %v575, %v708
      %v808 = vmul.f32 %v576, %v712
      %v809 = vadd.f32 %v745, %v746
      %v810 = vadd.f32 %v809, %v747
      %v811 = vadd.f32 %v810, %v748
      %v812 = vadd.f32 %v811, %v749
      %v813 = vadd.f32 %v812, %v750
      %v814 = vadd.f32 %v813, %v751
      %v815 = vadd.f32 %v814, %v752
      %v816 = vadd.f32 %v815, %v753
      %v817 = vadd.f32 %v816, %v754
      %v818 = vadd.f32 %v817, %v755
      %v819 = vadd.f32 %v818, %v756
      %v820 = vadd.f32 %v819, %v757
      %v821 = vadd.f32 %v820, %v758
      %v822 = vadd.f32 %v821, %v759
      %v823 = vadd.f32 %v822, %v760
      %v824 = vadd.f32 %v823, %v761
      %v825 = vadd.f32 %v824, %v762
      %v826 = vadd.f32 %v825, %v763
      %v827 = vadd.f32 %v826, %v764
      %v828 = vadd.f32 %v827, %v765
      %v829 = vadd.f32 %v828, %v766
      %v830 = vadd.f32 %v829, %v767
      %v831 = vadd.f32 %v830, %v768
      %v832 = vadd.f32 %v831, %v769
      %v833 = vadd.f32 %v832, %v770
      %v834 = vadd.f32 %v833, %v771
      %v835 = vadd.f32 %v834, %v772
      %v836 = vadd.f32 %v835, %v773
      %v837 = vadd.f32 %v836, %v774
      %v838 = vadd.f32 %v837, %v775
      %v839 = vadd.f32 %v838, %v776
      %v840 = vadd.f32 %v839, %v777
      %v841 = vadd.f32 %v840, %v778
      %v842 = vadd.f32 %v841, %v779
      %v843 = vadd.f32 %v842, %v780
      %v844 = vadd.f32 %v843, %v781
      %v845 = vadd.f32 %v844, %v782
      %v846 = vadd.f32 %v845, %v783
      %v847 = vadd.f32 %v846, %v784
      %v848 = vadd.f32 %v847, %v785
      %v849 = vadd.f32 %v848, %v786
      %v850 = vadd.f32 %v849, %v787
      %v851 = vadd.f32 %v850, %v788
      %v852 = vadd.f32 %v851, %v789
      %v853 = vadd.f32 %v852, %v790
      %v854 = vadd.f32 %v853, %v791
      %v855 = vadd.f32 %v854, %v792
      %v856 = vadd.f32 %v855, %v793
      %v857 = vadd.f32 %v856, %v794
      %v858 = vadd.f32 %v857, %v795
      %v859 = vadd.f32 %v858, %v796
      %v860 = vadd.f32 %v859, %v797
      %v861 = vadd.f32 %v860, %v798
      %v862 = vadd.f32 %v861, %v799
      %v863 = vadd.f32 %v862, %v800
      %v864 = vadd.f32 %v863, %v801
      %v865 = vadd.f32 %v864, %v802
      %v866 = vadd.f32 %v865, %v803
      %v867 = vadd.f32 %v866, %v804
      %v868 = vadd.f32 %v867, %v805
      %v869 = vadd.f32 %v868, %v806
      %v870 = vadd.f32 %v869, %v807
      %v871 = vadd.f32 %v870, %v808
      %872 = vadd.xlane.f32.xlu0 %v871
      %v873 = vpop.xlane.xlu0 %872
      %v874 = vrot.slane %v873, 4
      %v875 = vadd.f32 %v873, %v874
      %v876 = vrot.slane %v875, 2
      %v877 = vadd.f32 %v875, %v876
      %v878 = vrot.slane %v877, 1
      %v879 = vadd.f32 %v877, %v878
      %s880 = vtos %v879
      %v881 = vstv %s880
      %882 = vst [vmem:[%s318] sm:$0xff] %v881
      %s883 = sadd.s32 %s19, %s20
      %s884 = sadd.s32 %s883, %s21
      %p885 = scmp.lt.s32.totalorder %s884, 1
      %s886 = scalar_select %p885, %s884, 1
      %s887 = smul.addr %s886, 8
      %s888 = scalar_lea.vmem %s3, %s887
      // Predicated region
      $region33: #{_loss_fn.3} parent=31 // pred_check
        %p889 = pneg %p143
      $region34: #{_loss_fn.3} parent=31 // pred_check_branch
        %891 = sbr.rel (%p889) target = $region36
      $region35: #{_loss_fn.3} parent=31 // pred_region
        %s892 = sadd.s32 %s19, %s20
        %s893 = sadd.s32 %s892, %s21
      $region36: #{_loss_fn.3} parent=31 // pred_fallthru
        _
    $region32: #{_loss_fn.3} parent=5 // pred_fallthru
      _
    %p894 = scmp.le.s32.totalorder 2, %s9
    // Predicated region
    $region37: #{_loss_fn.3} parent=5 // pred_check
      %p895 = pneg %p894
    $region38: #{_loss_fn.3} parent=5 // pred_check_branch
      %897 = sbr.rel (%p895) target = $region40
    $region39: #{_loss_fn.3} parent=5 // pred_region
      %s898 = ssub.s32 %s9, 2
      // Predicated region
      $region41: #{_loss_fn.3} parent=39 // pred_check
        %p899 = pneg %p149
      $region42: #{_loss_fn.3} parent=39 // pred_check_branch
        %901 = sbr.rel (%p899) target = $region44
      $region43: #{_loss_fn.3} parent=39 // pred_region
        %s902 = sadd.s32 %s22, %s23
        %s903 = sadd.s32 %s902, %s24
        %p904 = scmp.lt.s32.totalorder %s903, 1
        %s905 = scalar_select %p904, %s903, 1
        %s906 = smul.addr %s905, 8
        %s907 = scalar_lea.vmem %s3, %s906
      $region44: #{_loss_fn.3} parent=39 // pred_fallthru
        _
    $region40: #{_loss_fn.3} parent=5 // pred_fallthru
      _
  $region6: #{_loss_fn.3} parent=0 // loop_footer
    %s13 = sadd.s32 1, %s9
  $region7: #{_loss_fn.3} parent=0 // loop_footer_branch
    %8 = sbr.rel target = $region3
  $region8: #{_loss_fn.3} parent=0 // loop_exit
    _

</llo_original>
